<compile_context>
chip_gen: v5e
topology: v5e:2x2
jax: 0.10.0
libtpu: 0.0.40
codegen_flags: <defaults>
</compile_context>

<pallas_src>
import math

import jax
import jax.numpy as jnp
from jax import lax
from jax.experimental import pallas as pl
from jax.experimental.pallas import tpu as pltpu


def _round_up(x, m):
    return ((x + m - 1) // m) * m


# ---------------------------------------------------------------------------
# Kernel 1: one GraphConv layer
#   out = dropout(relu( diag(norm_dst) @ (A @ Hs) @ W )),  Hs = diag(norm_src) @ H
# Grid (row tile i, reduction tile k); f32 accumulator in VMEM scratch.
# ---------------------------------------------------------------------------
def _gcn_kernel(a_ref, h_ref, norm_ref, w_ref, drop_ref, out_ref, acc_ref):
    # All grid queries at the kernel top level (NEVER inside pl.when bodies —
    # nested program_id is what broke the previous version's lowering).
    k = pl.program_id(1)
    nk = pl.num_programs(1)

    @pl.when(k == 0)
    def _():
        acc_ref[...] = jnp.zeros_like(acc_ref)

    # int8 0/1 adjacency -> bf16 (exact) right before the MXU; f32 accumulate.
    a = a_ref[...].astype(jnp.bfloat16)
    acc_ref[...] += jnp.dot(a, h_ref[...], preferred_element_type=jnp.float32)

    @pl.when(k == nk - 1)
    def _():
        # Destination-side norm, then the small W matmul on the MXU fast path
        # (bf16 x bf16 -> f32 accumulate), relu, dropout scale ({0, 2}).
        res = acc_ref[...] * norm_ref[...]
        res = jnp.dot(res.astype(jnp.bfloat16), w_ref[...],
                      preferred_element_type=jnp.float32)
        res = jnp.maximum(res, 0.0)                       # relu
        res = res * drop_ref[...].astype(jnp.float32)     # F.dropout(p=0.5)
        out_ref[...] = res.astype(out_ref.dtype)


def gcn_layer(a_i8, h_scaled, norm_col, w_bf16, drop_scale, *, tile=512):
    """a_i8: (Np, Np) int8 0/1 adjacency; h_scaled: (Np, Din_p) bf16 (already
    scaled by the source norm); norm_col: (Np, 1) f32 dest norm; w_bf16:
    (Din_p, Dout_p) bf16; drop_scale: (Np, Dout_p) bf16 values in {0, 2}."""
    n_p = a_i8.shape[0]
    d_in = h_scaled.shape[1]
    d_out = w_bf16.shape[1]
    grid = (n_p // tile, n_p // tile)

    return pl.pallas_call(
        _gcn_kernel,
        out_shape=jax.ShapeDtypeStruct((n_p, d_out), jnp.bfloat16),
        grid_spec=pltpu.PrefetchScalarGridSpec(
            num_scalar_prefetch=0,
            grid=grid,
            in_specs=[
                pl.BlockSpec((tile, tile), lambda i, k: (i, k)),     # A (int8)
                pl.BlockSpec((tile, d_in), lambda i, k: (k, 0)),     # Hs tile
                pl.BlockSpec((tile, 1), lambda i, k: (i, 0)),        # dst norm
                pl.BlockSpec((d_in, d_out), lambda i, k: (0, 0)),    # W resident
                pl.BlockSpec((tile, d_out), lambda i, k: (i, 0)),    # dropout scale
            ],
            out_specs=pl.BlockSpec((tile, d_out), lambda i, k: (i, 0)),
            scratch_shapes=[pltpu.VMEM((tile, d_in), jnp.float32)],
        ),
        compiler_params=pltpu.CompilerParams(
            # Row tiles are independent -> megacore-parallel on v7x; the k axis
            # carries the accumulator -> arbitrary (and innermost).
            dimension_semantics=("parallel", "arbitrary"),
            # > v5e's 16 MiB scoped default, well under v7x's 64 MiB physical;
            # the tile=512 working set is ~2 MiB, tile=1024 ~5 MiB.
            vmem_limit_bytes=32 * 1024 * 1024,
        ),
    )(a_i8, h_scaled, norm_col, w_bf16, drop_scale)


# ---------------------------------------------------------------------------
# Kernel 2: fused Conv1d (in_ch=1, out_ch=2, k=3, stride=1, pad=0) + hypersphere
# Single pass over node tiles of h^T: z^T = T^T @ h^T (banded conv-as-matmul),
# per-node L2 distance to the precomputed mean, clamp.  Output is lane-dense
# (1, tile) rows per grid step.
# ---------------------------------------------------------------------------
def _make_conv_hyper_kernel(c_out: int):
    def kernel(ht_ref, t_ref, bias_ref, mean_ref, r_ref, out_ref):
        # z^T tile for this block of nodes: (c_p, tile) = T^T @ H^T.
        z = jnp.dot(t_ref[...], ht_ref[...], preferred_element_type=jnp.float32)
        d = z + bias_ref[...] - mean_ref[...] + 1e-6        # pairwise_distance eps
        row = lax.broadcasted_iota(jnp.int32, d.shape, 0)
        d = jnp.where(row < c_out, d, 0.0)                  # zero padded conv rows
        radius = jnp.sqrt(jnp.sum(d * d, axis=0, keepdims=True))     # (1, tile)
        dis = jnp.clip(radius - r_ref[...], 0.0001, 1.0 - 0.0001)
        out_ref[...] = dis[None]                            # (1, 1, tile)
    return kernel


def conv1d_hypersphere(h2, w2x3, b2, ref_radius, *, hid, n_real, tile=512):
    """h2: (Np, Dp) bf16 (padded rows/cols exactly zero); w2x3: (2, 3); b2: (2,)."""
    n_p, d_p = h2.shape
    l_out = hid - 2
    c_out = 2 * l_out
    c_p = _round_up(c_out, 8)

    # Banded matrix T (hid, 2*l_out) so that conv1d(h) flattened == h @ T + bias.
    w23 = w2x3.astype(jnp.float32)
    t_cols = [sum(w23[c, kk] * jnp.eye(hid, l_out, -kk, dtype=jnp.float32)
                  for kk in range(3)) for c in range(2)]
    t_mat = jnp.concatenate(t_cols, axis=1)                       # (hid, c_out)
    bias = jnp.repeat(b2.astype(jnp.float32), l_out)              # (c_out,)

    # Column mean of z over the n_real valid rows.  Padded rows of h2 are exactly
    # zero, so summing every row is exact; mean(h @ T + b) == mean(h) @ T + b.
    mean_h = jnp.sum(h2[:, :hid].astype(jnp.float32), axis=0) / n_real
    mean_z = mean_h @ t_mat + bias                                # (c_out,)

    t_t = jnp.zeros((c_p, d_p), jnp.bfloat16).at[:c_out, :hid].set(
        t_mat.T.astype(jnp.bfloat16))
    bias_col = jnp.zeros((c_p, 1), jnp.float32).at[:c_out, 0].set(bias)
    mean_col = jnp.zeros((c_p, 1), jnp.float32).at[:c_out, 0].set(mean_z)
    r = ref_radius.reshape(1, 1).astype(jnp.float32)
    h_t = h2.T                                                    # (Dp, Np), XLA-side

    n_tiles = n_p // tile
    out = pl.pallas_call(
        _make_conv_hyper_kernel(c_out),
        out_shape=jax.ShapeDtypeStruct((n_tiles, 1, tile), jnp.float32),
        grid_spec=pltpu.PrefetchScalarGridSpec(
            num_scalar_prefetch=0,
            grid=(n_tiles,),
            in_specs=[
                pl.BlockSpec((d_p, tile), lambda i: (0, i)),      # h^T node tile
                pl.BlockSpec((c_p, d_p), lambda i: (0, 0)),       # T^T resident
                pl.BlockSpec((c_p, 1), lambda i: (0, 0)),         # bias column
                pl.BlockSpec((c_p, 1), lambda i: (0, 0)),         # mean column
                pl.BlockSpec((1, 1), lambda i: (0, 0)),           # ref_radius
            ],
            out_specs=pl.BlockSpec((1, 1, tile), lambda i: (i, 0, 0)),
        ),
        compiler_params=pltpu.CompilerParams(
            dimension_semantics=("parallel",),
            vmem_limit_bytes=32 * 1024 * 1024,
        ),
    )(h_t, t_t, bias_col, mean_col, r)
    return out.reshape(-1)


# ---------------------------------------------------------------------------
# Classifier forward (cheap padding / degree / mean math in XLA, hot path Pallas)
# ---------------------------------------------------------------------------
def classifier_forward(adj_with_self_loops, feat, params, *, dropout_seed=0,
                       training=True, tile=512):
    """adj_with_self_loops: (N, N) dense adjacency, A[i, j] = 1 iff edge j -> i,
    self-loops already added (== dgl.add_self_loop in the reference)."""
    n = adj_with_self_loops.shape[0]
    in_dim = feat.shape[1]
    hid = params["w_gcn0"].shape[1]

    # --- pad to TPU-friendly sizes (zero padding is an exact no-op) ----------
    n_p = _round_up(max(n, tile), tile)
    d_in_p = _round_up(in_dim, 128)
    d_hid_p = _round_up(hid, 128)

    # int8 0/1 adjacency in HBM (half the bytes of bf16; cast in-kernel).
    a_i8 = jnp.zeros((n_p, n_p), jnp.int8).at[:n, :n].set(
        adj_with_self_loops.astype(jnp.int8))
    # GraphConv normalization: norm = in_degree.clamp(min=1) ** -0.5.
    deg = jnp.clip(jnp.sum(a_i8.astype(jnp.float32), axis=1), 1.0, None)
    norm_col = (deg ** -0.5)[:, None].astype(jnp.float32)         # (Np, 1)

    w0 = jnp.zeros((d_in_p, d_hid_p), jnp.bfloat16).at[:in_dim, :hid].set(
        params["w_gcn0"].astype(jnp.bfloat16))
    w1 = jnp.zeros((d_hid_p, d_hid_p), jnp.bfloat16).at[:hid, :hid].set(
        params["w_gcn1"].astype(jnp.bfloat16))

    h = jnp.zeros((n_p, d_in_p), jnp.float32).at[:n, :in_dim].set(
        feat.astype(jnp.float32))

    key = jax.random.PRNGKey(dropout_seed)
    for layer, w in enumerate((w0, w1)):
        # Source-side normalization hoisted out of the (i, k) loop: applied once
        # per layer here instead of once per (row tile, k tile) inside the kernel.
        h_scaled = (h.astype(jnp.float32) * norm_col).astype(jnp.bfloat16)
        if training:
            keep = jax.random.bernoulli(jax.random.fold_in(key, layer), 0.5,
                                        (n_p, w.shape[1]))
            drop = jnp.where(keep, 2.0, 0.0).astype(jnp.bfloat16)  # 1/(1-p) = 2
        else:
            drop = jnp.ones((n_p, w.shape[1]), jnp.bfloat16)
        h = gcn_layer(a_i8, h_scaled, norm_col, w, drop, tile=tile)

    w1d = params["w_conv1d"].reshape(2, 3)
    dis_p = conv1d_hypersphere(h, w1d, params["b_conv1d"], params["ref_radius"],
                               hid=hid, n_real=n, tile=tile)
    return dis_p[:n], params["ref_radius"]


def init_params(key, in_dim, hid_dim):
    k0, k1, k2, k3 = jax.random.split(key, 4)
    # xavier_normal_ for GCN weights
    std0 = math.sqrt(2.0 / (in_dim + hid_dim))
    std1 = math.sqrt(2.0 / (hid_dim + hid_dim))
    w_gcn0 = std0 * jax.random.normal(k0, (in_dim, hid_dim), jnp.float32)
    w_gcn1 = std1 * jax.random.normal(k1, (hid_dim, hid_dim), jnp.float32)
    # kaiming_normal_(a=sqrt(5)) for conv1d weight (2, 1, 3); fan_in = 3
    gain = math.sqrt(2.0 / (1.0 + 5.0))
    std_c = gain / math.sqrt(3.0)
    w_conv1d = std_c * jax.random.normal(k2, (2, 1, 3), jnp.float32)
    bound = 1.0 / math.sqrt(3.0)
    b_conv1d = jax.random.uniform(k3, (2,), jnp.float32, -bound, bound)
    ref_radius = jnp.zeros((1,), jnp.float32)
    return {
        "w_gcn0": w_gcn0,
        "w_gcn1": w_gcn1,
        "w_conv1d": w_conv1d,
        "b_conv1d": b_conv1d,
        "ref_radius": ref_radius,
    }


if __name__ == "__main__":
    # Small shapes; tile=256 pads N=300 -> Np=512, giving a (2, 2) GCN grid that
    # exercises the k-accumulation and multi-row-tile paths.
    N, IN_DIM, HID_DIM = 300, 16, 32

    root = jax.random.PRNGKey(0)
    k_graph, k_feat, k_params = jax.random.split(root, 3)

    # Synthetic graph: sparse random directed edges, then dgl.add_self_loop.
    rand_a = (jax.random.uniform(k_graph, (N, N)) < 0.03).astype(jnp.float32)
    rand_a = rand_a * (1.0 - jnp.eye(N))          # drop pre-existing self loops
    adj = rand_a + jnp.eye(N)                     # add self loops

    feat = jax.random.normal(k_feat, (N, IN_DIM), jnp.float32)
    params = init_params(k_params, IN_DIM, HID_DIM)

    dis, r = classifier_forward(adj, feat, params, dropout_seed=0,
                                training=True, tile=256)
    dis = jax.block_until_ready(dis)
    r = jax.block_until_ready(r)

    assert dis.shape == (N,) and dis.dtype == jnp.float32
    assert r.shape == (1,)
    assert bool(jnp.all(jnp.isfinite(dis)))
    assert bool(jnp.all((dis >= 0.0001 - 1e-6) & (dis <= 0.9999 + 1e-6)))
    print("KERNEL_OK")
</pallas_src>

<mosaic_0001>
module attributes {stable_mosaic.version = 11 : i64} {
  func.func @_gcn_kernel(%arg0: i32, %arg1: i32, %arg2: memref<256x256xi8, #tpu.memory_space<vmem>>, %arg3: memref<256x128xbf16, #tpu.memory_space<vmem>>, %arg4: memref<256x1xf32, #tpu.memory_space<vmem>>, %arg5: memref<128x128xbf16, #tpu.memory_space<vmem>>, %arg6: memref<256x128xbf16, #tpu.memory_space<vmem>>, %arg7: memref<256x128xbf16, #tpu.memory_space<vmem>>, %arg8: memref<256x128xf32, #tpu.memory_space<vmem>>) attributes {dimension_semantics = [#tpu.dimension_semantics<parallel>, #tpu.dimension_semantics<arbitrary>], iteration_bounds = array<i64: 2, 2>, scalar_prefetch = 0 : i64, scratch_operands = 1 : i64, tpu.core_type = #tpu.core_type<tc>, window_params = [{transform_indices = @transform_0, window_bounds = array<i64: 256, 256>}, {transform_indices = @transform_1, window_bounds = array<i64: 256, 128>}, {transform_indices = @transform_2, window_bounds = array<i64: 256, 1>}, {pipeline_mode = #tpu.pipeline_mode<synchronous>, transform_indices = @transform_3, window_bounds = array<i64: 128, 128>}, {transform_indices = @transform_4, window_bounds = array<i64: 256, 128>}, {transform_indices = @transform_5, window_bounds = array<i64: 256, 128>}]} {
    %c0_i32 = arith.constant 0 : i32
    %0 = arith.cmpi eq, %arg1, %c0_i32 : i32
    %1 = arith.extui %0 : i1 to i32
    %c0_i32_0 = arith.constant 0 : i32
    %2 = arith.cmpi ne, %1, %c0_i32_0 : i32
    scf.if %2 {
      %cst_9 = arith.constant 0.000000e+00 : f32
      %13 = vector.broadcast %cst_9 : f32 to vector<256x128xf32>
      %c0_10 = arith.constant 0 : index
      %c0_11 = arith.constant 0 : index
      %14 = vector.load %arg8[%c0_10, %c0_11] : memref<256x128xf32, #tpu.memory_space<vmem>>, vector<256x128xf32>
      tpu.vector_store %arg8[%c0_10, %c0_11], %13 {strides = array<i32>} : memref<256x128xf32, #tpu.memory_space<vmem>>, vector<256x128xf32>,
    } else {
    }
    %c0 = arith.constant 0 : index
    %c0_1 = arith.constant 0 : index
    %3 = vector.load %arg2[%c0, %c0_1] : memref<256x256xi8, #tpu.memory_space<vmem>>, vector<256x256xi8>
    %4 = arith.sitofp %3 : vector<256x256xi8> to vector<256x256xbf16>
    %c0_2 = arith.constant 0 : index
    %c0_3 = arith.constant 0 : index
    %5 = vector.load %arg8[%c0_2, %c0_3] : memref<256x128xf32, #tpu.memory_space<vmem>>, vector<256x128xf32>
    %c0_4 = arith.constant 0 : index
    %c0_5 = arith.constant 0 : index
    %6 = vector.load %arg3[%c0_4, %c0_5] : memref<256x128xbf16, #tpu.memory_space<vmem>>, vector<256x128xbf16>
    %cst = arith.constant dense<0.000000e+00> : vector<256x128xf32>
    %7 = tpu.matmul %4, %6, %cst {dimension_numbers = #tpu.dot_dimension_numbers<[1], [0], [0], [1], [0, 0, 1, 1], [], []>} : vector<256x256xbf16>, vector<256x128xbf16>, vector<256x128xf32> -> vector<256x128xf32>
    %8 = arith.addf %5, %7 : vector<256x128xf32>
    %c0_6 = arith.constant 0 : index
    %c0_7 = arith.constant 0 : index
    %9 = vector.load %arg8[%c0_6, %c0_7] : memref<256x128xf32, #tpu.memory_space<vmem>>, vector<256x128xf32>
    tpu.vector_store %arg8[%c0_6, %c0_7], %8 {strides = array<i32>} : memref<256x128xf32, #tpu.memory_space<vmem>>, vector<256x128xf32>,
    %c1_i32 = arith.constant 1 : i32
    %10 = arith.cmpi eq, %arg1, %c1_i32 : i32
    %11 = arith.extui %10 : i1 to i32
    %c0_i32_8 = arith.constant 0 : i32
    %12 = arith.cmpi ne, %11, %c0_i32_8 : i32
    scf.if %12 {
      %c0_9 = arith.constant 0 : index
      %c0_10 = arith.constant 0 : index
      %13 = vector.load %arg8[%c0_9, %c0_10] : memref<256x128xf32, #tpu.memory_space<vmem>>, vector<256x128xf32>
      %c0_11 = arith.constant 0 : index
      %c0_12 = arith.constant 0 : index
      %14 = vector.load %arg4[%c0_11, %c0_12] : memref<256x1xf32, #tpu.memory_space<vmem>>, vector<256x1xf32>
      %15 = vector.broadcast %14 : vector<256x1xf32> to vector<256x128xf32>
      %16 = arith.mulf %13, %15 : vector<256x128xf32>
      %17 = arith.truncf %16 : vector<256x128xf32> to vector<256x128xbf16>
      %c0_13 = arith.constant 0 : index
      %c0_14 = arith.constant 0 : index
      %18 = vector.load %arg5[%c0_13, %c0_14] : memref<128x128xbf16, #tpu.memory_space<vmem>>, vector<128x128xbf16>
      %cst_15 = arith.constant dense<0.000000e+00> : vector<256x128xf32>
      %19 = tpu.matmul %17, %18, %cst_15 {dimension_numbers = #tpu.dot_dimension_numbers<[1], [0], [0], [1], [0, 0, 1, 1], [], []>} : vector<256x128xbf16>, vector<128x128xbf16>, vector<256x128xf32> -> vector<256x128xf32>
      %cst_16 = arith.constant 0.000000e+00 : f32
      %20 = vector.broadcast %cst_16 : f32 to vector<256x128xf32>
      %21 = arith.maximumf %19, %20 : vector<256x128xf32>
      %c0_17 = arith.constant 0 : index
      %c0_18 = arith.constant 0 : index
      %22 = vector.load %arg6[%c0_17, %c0_18] : memref<256x128xbf16, #tpu.memory_space<vmem>>, vector<256x128xbf16>
      %23 = arith.extf %22 : vector<256x128xbf16> to vector<256x128xf32>
      %24 = arith.mulf %21, %23 : vector<256x128xf32>
      %25 = arith.truncf %24 : vector<256x128xf32> to vector<256x128xbf16>
      %c0_19 = arith.constant 0 : index
      %c0_20 = arith.constant 0 : index
      %26 = vector.load %arg7[%c0_19, %c0_20] : memref<256x128xbf16, #tpu.memory_space<vmem>>, vector<256x128xbf16>
      tpu.vector_store %arg7[%c0_19, %c0_20], %25 {strides = array<i32>} : memref<256x128xbf16, #tpu.memory_space<vmem>>, vector<256x128xbf16>,
    } else {
    }
    return
  }
  func.func @transform_0(%arg0: i32, %arg1: i32) -> (i32, i32) {
    %c0_i32 = arith.constant 0 : i32
    return %arg0, %arg1 : i32, i32
  }
  func.func @transform_1(%arg0: i32, %arg1: i32) -> (i32, i32) {
    %c0_i32 = arith.constant 0 : i32
    %c0_i32_0 = arith.constant 0 : i32
    return %arg1, %c0_i32 : i32, i32
  }
  func.func @transform_2(%arg0: i32, %arg1: i32) -> (i32, i32) {
    %c0_i32 = arith.constant 0 : i32
    %c0_i32_0 = arith.constant 0 : i32
    return %arg0, %c0_i32 : i32, i32
  }
  func.func @transform_3(%arg0: i32, %arg1: i32) -> (i32, i32) {
    %c0_i32 = arith.constant 0 : i32
    %c0_i32_0 = arith.constant 0 : i32
    %c0_i32_1 = arith.constant 0 : i32
    return %c0_i32, %c0_i32_0 : i32, i32
  }
  func.func @transform_4(%arg0: i32, %arg1: i32) -> (i32, i32) {
    %c0_i32 = arith.constant 0 : i32
    %c0_i32_0 = arith.constant 0 : i32
    return %arg0, %c0_i32 : i32, i32
  }
  func.func @transform_5(%arg0: i32, %arg1: i32) -> (i32, i32) {
    %c0_i32 = arith.constant 0 : i32
    %c0_i32_0 = arith.constant 0 : i32
    return %arg0, %c0_i32 : i32, i32
  }
}

</mosaic_0001>

<llo_original>
// kernel: tpu_custom_call.1
$region0: #{tpu_custom_call.1}
  #allocation0 [shape = 'u32[]', space=smem, size = 0x4, offset = 0x4, fixed_abs, tag = 'smem constant byte address 0x4 - core index']
  #allocation1 [shape = 'u32[72,128]{1,0:T(1,128)}', space=vmem, size = 0x9000, scoped, tag = 'internal scratch']
  #allocation2 [shape = 'f32[256,128]{1,0:T(8,128)}', space=vmem, size = 0x20000, scoped, tag = 'scratch operand']
  %s0 = inlined_call_operand.vmem [shape: s8[512,512], index: 0, kind: input, shape index: {}]
  %s1 = inlined_call_operand.hbm [shape: bf16[512,128], index: 1, kind: input, shape index: {}]
  %s2 = inlined_call_operand.vmem [shape: f32[512,1], index: 2, kind: input, shape index: {}]
  %s3 = inlined_call_operand.hbm [shape: bf16[128,128], index: 3, kind: input, shape index: {}]
  %s4 = inlined_call_operand.hbm [shape: bf16[512,128], index: 4, kind: input, shape index: {}]
  %s5 = inlined_call_operand.hbm [shape: bf16[512,128], index: 5, kind: output, shape index: {}]
  %s6 = sld [smem:[#allocation0]]
  $region96: #{tpu_custom_call.1} parent=0
    _
  %s8 = ssub.s32 1, %s6
  %s9 = scalar_select 0, %s8, %s6
  $region1: #{tpu_custom_call.1} parent=0
    #allocation3 [shape = 'u8[131072]{0}', space=vmem, size = 0x20000, scoped, tag = 'input window, operand 0']
    #allocation4 [shape = 'u8[131072]{0}', space=vmem, size = 0x20000, scoped, tag = 'input window, operand 1']
    #allocation5 [shape = 's32[2]{0}', space=sflag, size = 0x8, scoped, tag = 'scoped memory for tpu_custom_call.1']
    #allocation6 [shape = 's32[2]{0}', space=sflag, size = 0x8, scoped, tag = 'scoped memory for tpu_custom_call.1']
    #allocation7 [shape = 'u8[32768]{0}', space=vmem, size = 0x8000, scoped, tag = 'input window, operand 3, single buffered']
    #allocation8 [shape = 's32[1]{0}', space=sflag, size = 0x4, scoped, tag = 'scoped memory for tpu_custom_call.1']
    #allocation9 [shape = 'u8[131072]{0}', space=vmem, size = 0x20000, scoped, tag = 'input window, operand 4']
    #allocation10 [shape = 'u8[131072]{0}', space=vmem, size = 0x20000, scoped, tag = 'output window, operand 0']
    %10 = vsyncpa [#allocation5], 0
    %s11 = scalar_lea.sflag [#allocation5], 1
    %12 = vsyncpa %s11, 0
    %13 = vsyncpa [#allocation8], 0
    %14 = vsyncpa [#allocation6], 0
    %s15 = scalar_lea.sflag [#allocation6], 1
    %16 = vsyncpa %s15, 0
    loop: start=0, step=1, limit=6
    $region2: #{tpu_custom_call.1} parent=1 // loop_pre_header
      _
    $region3: #{tpu_custom_call.1} parent=1 // loop_header
      %s18 = sphi 0, %s22
      %p19 = scmp.ge.s32.totalorder %s18, 6
      %s25 = sphi 0, %s37
      %s26 = sphi 0, %s33
      %s27 = sphi 0, %s25
      %s28 = sphi 0, %s26
      %s29 = sphi 0, %s27
      %s30 = sphi 0, %s28
      %s42 = sphi 0, %s44
      %s45 = sphi 0, %s42
      %s46 = sphi 0, %s45
      %s62 = sphi 0, %s46
      %s68 = sphi 0, %s70
      %s71 = sphi 0, %s68
      %s72 = sphi 0, %s71
      %s88 = sphi 0, %s72
      %s94 = sphi 0, %s96
      %s97 = sphi 0, %s94
      %s98 = sphi 0, %s97
      %s114 = sphi 0, %s98
      %s118 = sphi 0, %s118
      %s120 = sphi 0, %s118
      %s121 = sphi 0, %s120
      %s135 = sphi 0, %s121
      %s141 = sphi 0, %s143
      %s144 = sphi 0, %s141
      %s145 = sphi 0, %s144
      %s161 = sphi 0, %s145
      %s167 = sphi 0, %s169
      %s170 = sphi 0, %s167
      %s171 = sphi 0, %s170
      %s187 = sphi 0, %s171
    $region4: #{tpu_custom_call.1} parent=1 // loop_header_branch
      %21 = sbr.rel (%p19) target = $region8
    $region5: #{tpu_custom_call.1} parent=1 // loop_body
      %s23 = ssub.s32 %s18, 1
      %s24 = ssub.s32 %s18, 2
      %s31 = sadd.s32 1, %s26
      %p32 = scmp.ge.s32.totalorder %s31, 2
      %s33 = scalar_select %p32, 0, %s31
      %s34 = sadd.s32 1, %s25
      %s35 = scalar_select %p32, %s34, %s25
      %p36 = scmp.ge.s32.totalorder %s35, 2
      %s37 = scalar_select %p36, 0, %s35
      %s38 = ssub.s32 %s25, %s37
      %s39 = ssub.s32 %s26, %s33
      %s40 = sor.u32 %s38, %s39
      %p41 = scmp.eq.s32.totalorder %s40, 0
      %s43 = sadd.s32 %s42, 1
      %s44 = scalar_select %p41, %s42, %s43
      %p47 = pneg %p41
      %p48 = scmp.eq.s32.totalorder %s18, 3
      %p49 = por %p47, %p48
      %p50 = scmp.ne.s32.totalorder %s42, %s45
      %p51 = scmp.eq.s32.totalorder %s18, 0
      %p52 = por %p50, %p51
      %p53 = scmp.ne.s32.totalorder %s42, %s45
      %p54 = scmp.eq.s32.totalorder %s23, 3
      %p55 = por %p53, %p54
      %p56 = scmp.ne.s32.totalorder %s45, %s46
      %p57 = scmp.eq.s32.totalorder %s23, 0
      %p58 = por %p56, %p57
      %p59 = scmp.ne.s32.totalorder %s45, %s46
      %p60 = scmp.eq.s32.totalorder %s24, 3
      %p61 = por %p59, %p60
      %p63 = scmp.ne.s32.totalorder %s46, %s62
      %p64 = scmp.eq.s32.totalorder %s24, 0
      %p65 = por %p63, %p64
      %s66 = ssub.s32 %s26, %s33
      %p67 = scmp.eq.s32.totalorder %s66, 0
      %s69 = sadd.s32 %s68, 1
      %s70 = scalar_select %p67, %s68, %s69
      %p73 = pneg %p67
      %p74 = scmp.eq.s32.totalorder %s18, 3
      %p75 = por %p73, %p74
      %p76 = scmp.ne.s32.totalorder %s68, %s71
      %p77 = scmp.eq.s32.totalorder %s18, 0
      %p78 = por %p76, %p77
      %p79 = scmp.ne.s32.totalorder %s68, %s71
      %p80 = scmp.eq.s32.totalorder %s23, 3
      %p81 = por %p79, %p80
      %p82 = scmp.ne.s32.totalorder %s71, %s72
      %p83 = scmp.eq.s32.totalorder %s23, 0
      %p84 = por %p82, %p83
      %p85 = scmp.ne.s32.totalorder %s71, %s72
      %p86 = scmp.eq.s32.totalorder %s24, 3
      %p87 = por %p85, %p86
      %p89 = scmp.ne.s32.totalorder %s72, %s88
      %p90 = scmp.eq.s32.totalorder %s24, 0
      %p91 = por %p89, %p90
      %s92 = ssub.s32 %s25, %s37
      %p93 = scmp.eq.s32.totalorder %s92, 0
      %s95 = sadd.s32 %s94, 1
      %s96 = scalar_select %p93, %s94, %s95
      %p99 = pneg %p93
      %p100 = scmp.eq.s32.totalorder %s18, 3
      %p101 = por %p99, %p100
      %p102 = scmp.ne.s32.totalorder %s94, %s97
      %p103 = scmp.eq.s32.totalorder %s18, 0
      %p104 = por %p102, %p103
      %p105 = scmp.ne.s32.totalorder %s94, %s97
      %p106 = scmp.eq.s32.totalorder %s23, 3
      %p107 = por %p105, %p106
      %p108 = scmp.ne.s32.totalorder %s97, %s98
      %p109 = scmp.eq.s32.totalorder %s23, 0
      %p110 = por %p108, %p109
      %p111 = scmp.ne.s32.totalorder %s97, %s98
      %p112 = scmp.eq.s32.totalorder %s24, 3
      %p113 = por %p111, %p112
      %p115 = scmp.ne.s32.totalorder %s98, %s114
      %p116 = scmp.eq.s32.totalorder %s24, 0
      %p117 = por %p115, %p116
      %s119 = sadd.s32 %s118, 1
      %p122 = scmp.eq.s32.totalorder %s18, 3
      %p123 = scmp.ne.s32.totalorder %s118, %s120
      %p124 = scmp.eq.s32.totalorder %s18, 0
      %p125 = por %p123, %p124
      %p126 = scmp.ne.s32.totalorder %s118, %s120
      %p127 = scmp.eq.s32.totalorder %s23, 3
      %p128 = por %p126, %p127
      %p129 = scmp.ne.s32.totalorder %s120, %s121
      %p130 = scmp.eq.s32.totalorder %s23, 0
      %p131 = por %p129, %p130
      %p132 = scmp.ne.s32.totalorder %s120, %s121
      %p133 = scmp.eq.s32.totalorder %s24, 3
      %p134 = por %p132, %p133
      %p136 = scmp.ne.s32.totalorder %s121, %s135
      %p137 = scmp.eq.s32.totalorder %s24, 0
      %p138 = por %p136, %p137
      %s139 = ssub.s32 %s25, %s37
      %p140 = scmp.eq.s32.totalorder %s139, 0
      %s142 = sadd.s32 %s141, 1
      %s143 = scalar_select %p140, %s141, %s142
      %p146 = pneg %p140
      %p147 = scmp.eq.s32.totalorder %s18, 3
      %p148 = por %p146, %p147
      %p149 = scmp.ne.s32.totalorder %s141, %s144
      %p150 = scmp.eq.s32.totalorder %s18, 0
      %p151 = por %p149, %p150
      %p152 = scmp.ne.s32.totalorder %s141, %s144
      %p153 = scmp.eq.s32.totalorder %s23, 3
      %p154 = por %p152, %p153
      %p155 = scmp.ne.s32.totalorder %s144, %s145
      %p156 = scmp.eq.s32.totalorder %s23, 0
      %p157 = por %p155, %p156
      %p158 = scmp.ne.s32.totalorder %s144, %s145
      %p159 = scmp.eq.s32.totalorder %s24, 3
      %p160 = por %p158, %p159
      %p162 = scmp.ne.s32.totalorder %s145, %s161
      %p163 = scmp.eq.s32.totalorder %s24, 0
      %p164 = por %p162, %p163
      %s165 = ssub.s32 %s25, %s37
      %p166 = scmp.eq.s32.totalorder %s165, 0
      %s168 = sadd.s32 %s167, 1
      %s169 = scalar_select %p166, %s167, %s168
      %p172 = pneg %p166
      %p173 = scmp.eq.s32.totalorder %s18, 3
      %p174 = por %p172, %p173
      %p175 = scmp.ne.s32.totalorder %s167, %s170
      %p176 = scmp.eq.s32.totalorder %s18, 0
      %p177 = por %p175, %p176
      %p178 = scmp.ne.s32.totalorder %s167, %s170
      %p179 = scmp.eq.s32.totalorder %s23, 3
      %p180 = por %p178, %p179
      %p181 = scmp.ne.s32.totalorder %s170, %s171
      %p182 = scmp.eq.s32.totalorder %s23, 0
      %p183 = por %p181, %p182
      %p184 = scmp.ne.s32.totalorder %s170, %s171
      %p185 = scmp.eq.s32.totalorder %s24, 3
      %p186 = por %p184, %p185
      %p188 = scmp.ne.s32.totalorder %s171, %s187
      %p189 = scmp.eq.s32.totalorder %s24, 0
      %p190 = por %p188, %p189
      %p191 = scmp.le.s32.totalorder 1, %s18
      %p192 = scmp.lt.s32.totalorder %s18, 5
      %p193 = pnand %p191, %p192
      %p194 = pneg %p193
      // Predicated region
      $region9: #{tpu_custom_call.1} parent=5 // pred_check
        _
      $region10: #{tpu_custom_call.1} parent=5 // pred_check_branch
        %196 = sbr.rel (%p193) target = $region12
      $region11: #{tpu_custom_call.1} parent=5 // pred_region
        %s197 = ssub.s32 %s18, 1
        // Predicated region
        $region13: #{tpu_custom_call.1} parent=11 // pred_check
          %p198 = pneg %p131
        $region14: #{tpu_custom_call.1} parent=11 // pred_check_branch
          %200 = sbr.rel (%p198) target = $region16
        $region15: #{tpu_custom_call.1} parent=11 // pred_region
          %202 = vsyncadd [#allocation8], 0
          %s203 = sshll.u32 %s3, 4
          %s204 = int_to_ptr.hbm [resolvable:$true] %s203
          %s205 = sshll.u32 [#allocation7], 4
          %s206 = int_to_ptr.vmem [resolvable:$true] %s205
          %211 = dma.hbm_to_vmem [thread:$0]  %s204, 1024, %s206, [#allocation8], 64, 64, 4
        $region16: #{tpu_custom_call.1} parent=11 // pred_fallthru
          _
      $region12: #{tpu_custom_call.1} parent=5 // pred_fallthru
        _
      %p212 = scmp.lt.s32.totalorder %s18, 4
      // Predicated region
      $region17: #{tpu_custom_call.1} parent=5 // pred_check
        %p213 = pneg %p212
      $region18: #{tpu_custom_call.1} parent=5 // pred_check_branch
        %215 = sbr.rel (%p213) target = $region20
      $region19: #{tpu_custom_call.1} parent=5 // pred_region
        // Predicated region
        $region21: #{tpu_custom_call.1} parent=19 // pred_check
          %p216 = pneg %p52
        $region22: #{tpu_custom_call.1} parent=19 // pred_check_branch
          %218 = sbr.rel (%p216) target = $region24
        $region23: #{tpu_custom_call.1} parent=19 // pred_region
          %s219 = sand.u32 %s42, 1
          %s220 = sand.u32 %s42, 1
          %s221 = smul.addr %s220, 128
          %s222 = scalar_lea.vmem [#allocation3], %s221
          %s223 = smul.u32 8, %s25
          %s224 = smul.u32 2, %s26
          %s225 = smul.addr %s223, 4
          %s226 = sadd.s32 %s224, %s225
          %s227 = smul.addr %s226, 8
          %s228 = scalar_lea.vmem %s0, %s227
          // Predicated region
          $region25: #{tpu_custom_call.1} parent=23 // pred_check
            _
          $region26: #{tpu_custom_call.1} parent=23 // pred_check_branch
            %230 = sbr.rel (0) target = $region28
          $region27: #{tpu_custom_call.1} parent=23 // pred_region
            // Predicated region
            $region29: #{tpu_custom_call.1} parent=27 // pred_check
              _
            $region30: #{tpu_custom_call.1} parent=27 // pred_check_branch
              %232 = sbr.rel (0) target = $region32
            $region31: #{tpu_custom_call.1} parent=27 // pred_region
              loop: start=0, step=1, limit=1
              $region33: #{tpu_custom_call.1} parent=31 // loop_pre_header
                _
              $region34: #{tpu_custom_call.1} parent=31 // loop_header
                %s234 = sphi 0, %s238
                %p235 = scmp.ge.s32.totalorder %s234, 1
                %s239 = sphi %s228, %s228
                %s240 = sphi %s222, %s222
              $region35: #{tpu_custom_call.1} parent=31 // loop_header_branch
                %237 = sbr.rel (%p235) target = $region39
              $region36: #{tpu_custom_call.1} parent=31 // loop_body
                %v241 = vld [vmem:[%s239] sm:$0xff]
                %242 = vst [vmem:[%s240] sm:$0xff] %v241
                %v243 = vld [vmem:[%s239 + $0x8] sm:$0xff]
                %244 = vst [vmem:[%s240 + $0x8] sm:$0xff] %v243
                %v245 = vld [vmem:[%s239 + $0x20] sm:$0xff]
                %246 = vst [vmem:[%s240 + $0x10] sm:$0xff] %v245
                %v247 = vld [vmem:[%s239 + $0x28] sm:$0xff]
                %248 = vst [vmem:[%s240 + $0x18] sm:$0xff] %v247
                %v249 = vld [vmem:[%s239 + $0x40] sm:$0xff]
                %250 = vst [vmem:[%s240 + $0x20] sm:$0xff] %v249
                %v251 = vld [vmem:[%s239 + $0x48] sm:$0xff]
                %252 = vst [vmem:[%s240 + $0x28] sm:$0xff] %v251
                %v253 = vld [vmem:[%s239 + $0x60] sm:$0xff]
                %254 = vst [vmem:[%s240 + $0x30] sm:$0xff] %v253
                %v255 = vld [vmem:[%s239 + $0x68] sm:$0xff]
                %256 = vst [vmem:[%s240 + $0x38] sm:$0xff] %v255
                %v257 = vld [vmem:[%s239 + $0x80] sm:$0xff]
                %258 = vst [vmem:[%s240 + $0x40] sm:$0xff] %v257
                %v259 = vld [vmem:[%s239 + $0x88] sm:$0xff]
                %260 = vst [vmem:[%s240 + $0x48] sm:$0xff] %v259
                %v261 = vld [vmem:[%s239 + $0xa0] sm:$0xff]
                %262 = vst [vmem:[%s240 + $0x50] sm:$0xff] %v261
                %v263 = vld [vmem:[%s239 + $0xa8] sm:$0xff]
                %264 = vst [vmem:[%s240 + $0x58] sm:$0xff] %v263
                %v265 = vld [vmem:[%s239 + $0xc0] sm:$0xff]
                %266 = vst [vmem:[%s240 + $0x60] sm:$0xff] %v265
                %v267 = vld [vmem:[%s239 + $0xc8] sm:$0xff]
                %268 = vst [vmem:[%s240 + $0x68] sm:$0xff] %v267
                %v269 = vld [vmem:[%s239 + $0xe0] sm:$0xff]
                %270 = vst [vmem:[%s240 + $0x70] sm:$0xff] %v269
                %v271 = vld [vmem:[%s239 + $0xe8] sm:$0xff]
                %272 = vst [vmem:[%s240 + $0x78] sm:$0xff] %v271
              $region37: #{tpu_custom_call.1} parent=31 // loop_footer
                %s238 = sadd.s32 1, %s234
              $region38: #{tpu_custom_call.1} parent=31 // loop_footer_branch
                %233 = sbr.rel target = $region34
              $region39: #{tpu_custom_call.1} parent=31 // loop_exit
                _
            $region32: #{tpu_custom_call.1} parent=27 // pred_fallthru
              _
            // Predicated region
            $region40: #{tpu_custom_call.1} parent=27 // pred_check
              _
            $region41: #{tpu_custom_call.1} parent=27 // pred_check_branch
              %274 = sbr.rel target = $region43
            $region42: #{tpu_custom_call.1} parent=27 // pred_region
              _
            $region43: #{tpu_custom_call.1} parent=27 // pred_fallthru
              _
          $region28: #{tpu_custom_call.1} parent=23 // pred_fallthru
            _
          %275 = vnop
        $region24: #{tpu_custom_call.1} parent=19 // pred_fallthru
          _
        // Predicated region
        $region44: #{tpu_custom_call.1} parent=19 // pred_check
          %p276 = pneg %p78
        $region45: #{tpu_custom_call.1} parent=19 // pred_check_branch
          %278 = sbr.rel (%p276) target = $region47
        $region46: #{tpu_custom_call.1} parent=19 // pred_region
          %s279 = sand.u32 %s18, 1
          %s280 = scalar_lea.sflag [#allocation5], %s279
          %s281 = sand.u32 %s68, 1
          %s282 = smul.addr %s281, 128
          %s283 = scalar_lea.vmem [#allocation4], %s282
          %s284 = smul.u32 32, %s26
          %286 = vsyncadd %s280, 0
          %s287 = smul.addr %s284, 4
          %s288 = scalar_lea.hbm %s1, %s287
          %s289 = sshll.u32 %s288, 4
          %s290 = int_to_ptr.hbm [resolvable:$true] %s289
          %s291 = sshll.u32 %s283, 4
          %s292 = int_to_ptr.vmem [resolvable:$true] %s291
          %297 = dma.hbm_to_vmem [thread:$0]  %s290, 2048, %s292, %s280, 64, 64, 4
        $region47: #{tpu_custom_call.1} parent=19 // pred_fallthru
          _
        // Predicated region
        $region48: #{tpu_custom_call.1} parent=19 // pred_check
          %p298 = pneg %p104
        $region49: #{tpu_custom_call.1} parent=19 // pred_check_branch
          %300 = sbr.rel (%p298) target = $region51
        $region50: #{tpu_custom_call.1} parent=19 // pred_region
          %s301 = smul.u32 32, %s25
          %p302 = scmp.lt.s32.totalorder %s301, 63
          %s303 = scalar_select %p302, %s301, 63
          %s304 = smul.addr %s303, 8
          %s305 = scalar_lea.vmem %s2, %s304
          %s306 = smul.u32 32, %s25
        $region51: #{tpu_custom_call.1} parent=19 // pred_fallthru
          _
        // Predicated region
        $region52: #{tpu_custom_call.1} parent=19 // pred_check
          %p307 = pneg %p151
        $region53: #{tpu_custom_call.1} parent=19 // pred_check_branch
          %309 = sbr.rel (%p307) target = $region55
        $region54: #{tpu_custom_call.1} parent=19 // pred_region
          %s310 = sand.u32 %s18, 1
          %s311 = scalar_lea.sflag [#allocation5], %s310
          %s312 = sand.u32 %s141, 1
          %s313 = smul.addr %s312, 128
          %s314 = scalar_lea.vmem [#allocation9], %s313
          %s315 = smul.u32 32, %s25
          %317 = vsyncadd %s311, 0
          %s318 = smul.addr %s315, 4
          %s319 = scalar_lea.hbm %s4, %s318
          %s320 = sshll.u32 %s319, 4
          %s321 = int_to_ptr.hbm [resolvable:$true] %s320
          %s322 = sshll.u32 %s314, 4
          %s323 = int_to_ptr.vmem [resolvable:$true] %s322
          %328 = dma.hbm_to_vmem [thread:$0]  %s321, 2048, %s323, %s311, 64, 64, 4
        $region55: #{tpu_custom_call.1} parent=19 // pred_fallthru
          _
      $region20: #{tpu_custom_call.1} parent=5 // pred_fallthru
        _
      %p329 = scmp.le.s32.totalorder 1, %s18
      %p330 = scmp.lt.s32.totalorder %s18, 5
      %p331 = pnand %p329, %p330
      %p332 = pneg %p331
      // Predicated region
      $region56: #{tpu_custom_call.1} parent=5 // pred_check
        _
      $region57: #{tpu_custom_call.1} parent=5 // pred_check_branch
        %334 = sbr.rel (%p331) target = $region59
      $region58: #{tpu_custom_call.1} parent=5 // pred_region
        %s335 = ssub.s32 %s18, 1
        %s336 = sand.u32 %s45, 1
        %s337 = sand.u32 %s45, 1
        %s338 = smul.addr %s337, 128
        %s339 = scalar_lea.vmem [#allocation3], %s338
        // Predicated region
        $region60: #{tpu_custom_call.1} parent=58 // pred_check
          %p340 = pneg %p58
        $region61: #{tpu_custom_call.1} parent=58 // pred_check_branch
          %342 = sbr.rel (%p340) target = $region63
        $region62: #{tpu_custom_call.1} parent=58 // pred_region
          _
        $region63: #{tpu_custom_call.1} parent=58 // pred_fallthru
          _
        %s343 = sand.u32 %s23, 1
        %s344 = scalar_lea.sflag [#allocation5], %s343
        %s345 = sand.u32 %s71, 1
        %s346 = smul.addr %s345, 128
        %s347 = scalar_lea.vmem [#allocation4], %s346
        // Predicated region
        $region64: #{tpu_custom_call.1} parent=58 // pred_check
          %p348 = pneg %p84
        $region65: #{tpu_custom_call.1} parent=58 // pred_check_branch
          %350 = sbr.rel (%p348) target = $region67
        $region66: #{tpu_custom_call.1} parent=58 // pred_region
          %352 = dma.done %s344, 2048
        $region67: #{tpu_custom_call.1} parent=58 // pred_fallthru
          _
        // Predicated region
        $region68: #{tpu_custom_call.1} parent=58 // pred_check
          %p353 = pneg %p131
        $region69: #{tpu_custom_call.1} parent=58 // pred_check_branch
          %355 = sbr.rel (%p353) target = $region71
        $region70: #{tpu_custom_call.1} parent=58 // pred_region
          %357 = dma.done [#allocation8], 1024
        $region71: #{tpu_custom_call.1} parent=58 // pred_fallthru
          _
        %s358 = sand.u32 %s23, 1
        %s359 = scalar_lea.sflag [#allocation5], %s358
        %s360 = sand.u32 %s144, 1
        %s361 = smul.addr %s360, 128
        %s362 = scalar_lea.vmem [#allocation9], %s361
        // Predicated region
        $region72: #{tpu_custom_call.1} parent=58 // pred_check
          %p363 = pneg %p157
        $region73: #{tpu_custom_call.1} parent=58 // pred_check_branch
          %365 = sbr.rel (%p363) target = $region75
        $region74: #{tpu_custom_call.1} parent=58 // pred_region
          %367 = dma.done %s359, 2048
        $region75: #{tpu_custom_call.1} parent=58 // pred_fallthru
          _
        %s368 = sand.u32 %s45, 1
        %s369 = sand.u32 %s45, 1
        %s370 = smul.addr %s369, 128
        %s371 = scalar_lea.vmem [#allocation3], %s370
        %p372 = pneg %p58
        %p373 = pneg %p55
        %s374 = sand.u32 %s23, 1
        %s375 = scalar_lea.sflag [#allocation5], %s374
        %s376 = sand.u32 %s71, 1
        %s377 = smul.addr %s376, 128
        %s378 = scalar_lea.vmem [#allocation4], %s377
        %p379 = pneg %p84
        %p380 = pneg %p81
        %s381 = smul.u32 32, %s27
        %p382 = scmp.lt.s32.totalorder %s381, 63
        %s383 = scalar_select %p382, %s381, 63
        %s384 = smul.addr %s383, 8
        %s385 = scalar_lea.vmem %s2, %s384
        %p386 = pneg %p110
        %p387 = pneg %p107
        %p388 = pneg %p131
        %p389 = pneg %p128
        %s390 = sand.u32 %s23, 1
        %s391 = scalar_lea.sflag [#allocation5], %s390
        %s392 = sand.u32 %s144, 1
        %s393 = smul.addr %s392, 128
        %s394 = scalar_lea.vmem [#allocation9], %s393
        %p395 = pneg %p157
        %p396 = pneg %p154
        %p397 = pneg %p183
        %p398 = pneg %p180
        %s399 = sand.u32 %s170, 1
        %s400 = scalar_lea.sflag [#allocation6], %s399
        %s401 = sand.u32 %s170, 1
        %s402 = smul.addr %s401, 128
        %s403 = scalar_lea.vmem [#allocation10], %s402
        %s404 = smul.u32 8, %s27
        %s405 = smul.u32 2, %s28
        %s406 = smul.u32 32, %s28
        %s407 = smul.u32 32, %s27
        %p408 = scmp.lt.s32.totalorder %s407, 63
        %s409 = scalar_select %p408, %s407, 63
        %s410 = smul.addr %s409, 8
        %s411 = scalar_lea.vmem %s2, %s410
        %s412 = smul.u32 32, %s27
        %s413 = smul.u32 32, %s27
        %s414 = smul.u32 32, %s27
        %p415 = scmp.eq.s32.totalorder %s28, 0
        // Predicated region
        $region76: #{tpu_custom_call.1} parent=58 // pred_check
          %p416 = pneg %p415
        $region77: #{tpu_custom_call.1} parent=58 // pred_check_branch
          %418 = sbr.rel (%p416) target = $region79
        $region78: #{tpu_custom_call.1} parent=58 // pred_region
          %419 = vst [vmem:[#allocation2] sm:$0xff] 0.0
          %420 = vst [vmem:[#allocation2 + $0x8] sm:$0xff] 0.0
          %421 = vst [vmem:[#allocation2 + $0x10] sm:$0xff] 0.0
          %422 = vst [vmem:[#allocation2 + $0x18] sm:$0xff] 0.0
          %423 = vst [vmem:[#allocation2 + $0x20] sm:$0xff] 0.0
          %424 = vst [vmem:[#allocation2 + $0x28] sm:$0xff] 0.0
          %425 = vst [vmem:[#allocation2 + $0x30] sm:$0xff] 0.0
          %426 = vst [vmem:[#allocation2 + $0x38] sm:$0xff] 0.0
          %427 = vst [vmem:[#allocation2 + $0x40] sm:$0xff] 0.0
          %428 = vst [vmem:[#allocation2 + $0x48] sm:$0xff] 0.0
          %429 = vst [vmem:[#allocation2 + $0x50] sm:$0xff] 0.0
          %430 = vst [vmem:[#allocation2 + $0x58] sm:$0xff] 0.0
          %431 = vst [vmem:[#allocation2 + $0x60] sm:$0xff] 0.0
          %432 = vst [vmem:[#allocation2 + $0x68] sm:$0xff] 0.0
          %433 = vst [vmem:[#allocation2 + $0x70] sm:$0xff] 0.0
          %434 = vst [vmem:[#allocation2 + $0x78] sm:$0xff] 0.0
          %435 = vst [vmem:[#allocation2 + $0x80] sm:$0xff] 0.0
          %436 = vst [vmem:[#allocation2 + $0x88] sm:$0xff] 0.0
          %437 = vst [vmem:[#allocation2 + $0x90] sm:$0xff] 0.0
          %438 = vst [vmem:[#allocation2 + $0x98] sm:$0xff] 0.0
          %439 = vst [vmem:[#allocation2 + $0xa0] sm:$0xff] 0.0
          %440 = vst [vmem:[#allocation2 + $0xa8] sm:$0xff] 0.0
          %441 = vst [vmem:[#allocation2 + $0xb0] sm:$0xff] 0.0
          %442 = vst [vmem:[#allocation2 + $0xb8] sm:$0xff] 0.0
          %443 = vst [vmem:[#allocation2 + $0xc0] sm:$0xff] 0.0
          %444 = vst [vmem:[#allocation2 + $0xc8] sm:$0xff] 0.0
          %445 = vst [vmem:[#allocation2 + $0xd0] sm:$0xff] 0.0
          %446 = vst [vmem:[#allocation2 + $0xd8] sm:$0xff] 0.0
          %447 = vst [vmem:[#allocation2 + $0xe0] sm:$0xff] 0.0
          %448 = vst [vmem:[#allocation2 + $0xe8] sm:$0xff] 0.0
          %449 = vst [vmem:[#allocation2 + $0xf0] sm:$0xff] 0.0
          %450 = vst [vmem:[#allocation2 + $0xf8] sm:$0xff] 0.0
        $region79: #{tpu_custom_call.1} parent=58 // pred_fallthru
          _
        %v451 = vld [vmem:[%s339] sm:$0xff]
        %v452 = vld [vmem:[%s339 + $0x8] sm:$0xff]
        %v453 = vld [vmem:[%s339 + $0x10] sm:$0xff]
        %v454 = vld [vmem:[%s339 + $0x18] sm:$0xff]
        %v455 = vld [vmem:[%s339 + $0x20] sm:$0xff]
        %v456 = vld [vmem:[%s339 + $0x28] sm:$0xff]
        %v457 = vld [vmem:[%s339 + $0x30] sm:$0xff]
        %v458 = vld [vmem:[%s339 + $0x38] sm:$0xff]
        %v459 = vld [vmem:[%s339 + $0x40] sm:$0xff]
        %v460 = vld [vmem:[%s339 + $0x48] sm:$0xff]
        %v461 = vld [vmem:[%s339 + $0x50] sm:$0xff]
        %v462 = vld [vmem:[%s339 + $0x58] sm:$0xff]
        %v463 = vld [vmem:[%s339 + $0x60] sm:$0xff]
        %v464 = vld [vmem:[%s339 + $0x68] sm:$0xff]
        %v465 = vld [vmem:[%s339 + $0x70] sm:$0xff]
        %v466 = vld [vmem:[%s339 + $0x78] sm:$0xff]
        %v467 = vunpack.c.0.s8 %v451
        %v468 = vunpack.c.0.s8 %v452
        %v469 = vunpack.c.1.s8 %v451
        %v470 = vunpack.c.1.s8 %v452
        %v471 = vunpack.c.2.s8 %v451
        %v472 = vunpack.c.2.s8 %v452
        %v473 = vunpack.c.3.s8 %v451
        %v474 = vunpack.c.3.s8 %v452
        %v475 = vunpack.c.0.s8 %v453
        %v476 = vunpack.c.0.s8 %v454
        %v477 = vunpack.c.1.s8 %v453
        %v478 = vunpack.c.1.s8 %v454
        %v479 = vunpack.c.2.s8 %v453
        %v480 = vunpack.c.2.s8 %v454
        %v481 = vunpack.c.3.s8 %v453
        %v482 = vunpack.c.3.s8 %v454
        %v483 = vunpack.c.0.s8 %v455
        %v484 = vunpack.c.0.s8 %v456
        %v485 = vunpack.c.1.s8 %v455
        %v486 = vunpack.c.1.s8 %v456
        %v487 = vunpack.c.2.s8 %v455
        %v488 = vunpack.c.2.s8 %v456
        %v489 = vunpack.c.3.s8 %v455
        %v490 = vunpack.c.3.s8 %v456
        %v491 = vunpack.c.0.s8 %v457
        %v492 = vunpack.c.0.s8 %v458
        %v493 = vunpack.c.1.s8 %v457
        %v494 = vunpack.c.1.s8 %v458
        %v495 = vunpack.c.2.s8 %v457
        %v496 = vunpack.c.2.s8 %v458
        %v497 = vunpack.c.3.s8 %v457
        %v498 = vunpack.c.3.s8 %v458
        %v499 = vunpack.c.0.s8 %v459
        %v500 = vunpack.c.0.s8 %v460
        %v501 = vunpack.c.1.s8 %v459
        %v502 = vunpack.c.1.s8 %v460
        %v503 = vunpack.c.2.s8 %v459
        %v504 = vunpack.c.2.s8 %v460
        %v505 = vunpack.c.3.s8 %v459
        %v506 = vunpack.c.3.s8 %v460
        %v507 = vunpack.c.0.s8 %v461
        %v508 = vunpack.c.0.s8 %v462
        %v509 = vunpack.c.1.s8 %v461
        %v510 = vunpack.c.1.s8 %v462
        %v511 = vunpack.c.2.s8 %v461
        %v512 = vunpack.c.2.s8 %v462
        %v513 = vunpack.c.3.s8 %v461
        %v514 = vunpack.c.3.s8 %v462
        %v515 = vunpack.c.0.s8 %v463
        %v516 = vunpack.c.0.s8 %v464
        %v517 = vunpack.c.1.s8 %v463
        %v518 = vunpack.c.1.s8 %v464
        %v519 = vunpack.c.2.s8 %v463
        %v520 = vunpack.c.2.s8 %v464
        %v521 = vunpack.c.3.s8 %v463
        %v522 = vunpack.c.3.s8 %v464
        %v523 = vunpack.c.0.s8 %v465
        %v524 = vunpack.c.0.s8 %v466
        %v525 = vunpack.c.1.s8 %v465
        %v526 = vunpack.c.1.s8 %v466
        %v527 = vunpack.c.2.s8 %v465
        %v528 = vunpack.c.2.s8 %v466
        %v529 = vunpack.c.3.s8 %v465
        %v530 = vunpack.c.3.s8 %v466
        %v531 = vcvt.s32.f32 %v467
        %v532 = vcvt.s32.f32 %v468
        %v533 = vcvt.s32.f32 %v469
        %v534 = vcvt.s32.f32 %v470
        %v535 = vcvt.s32.f32 %v471
        %v536 = vcvt.s32.f32 %v472
        %v537 = vcvt.s32.f32 %v473
        %v538 = vcvt.s32.f32 %v474
        %v539 = vcvt.s32.f32 %v475
        %v540 = vcvt.s32.f32 %v476
        %v541 = vcvt.s32.f32 %v477
        %v542 = vcvt.s32.f32 %v478
        %v543 = vcvt.s32.f32 %v479
        %v544 = vcvt.s32.f32 %v480
        %v545 = vcvt.s32.f32 %v481
        %v546 = vcvt.s32.f32 %v482
        %v547 = vcvt.s32.f32 %v483
        %v548 = vcvt.s32.f32 %v484
        %v549 = vcvt.s32.f32 %v485
        %v550 = vcvt.s32.f32 %v486
        %v551 = vcvt.s32.f32 %v487
        %v552 = vcvt.s32.f32 %v488
        %v553 = vcvt.s32.f32 %v489
        %v554 = vcvt.s32.f32 %v490
        %v555 = vcvt.s32.f32 %v491
        %v556 = vcvt.s32.f32 %v492
        %v557 = vcvt.s32.f32 %v493
        %v558 = vcvt.s32.f32 %v494
        %v559 = vcvt.s32.f32 %v495
        %v560 = vcvt.s32.f32 %v496
        %v561 = vcvt.s32.f32 %v497
        %v562 = vcvt.s32.f32 %v498
        %v563 = vcvt.s32.f32 %v499
        %v564 = vcvt.s32.f32 %v500
        %v565 = vcvt.s32.f32 %v501
        %v566 = vcvt.s32.f32 %v502
        %v567 = vcvt.s32.f32 %v503
        %v568 = vcvt.s32.f32 %v504
        %v569 = vcvt.s32.f32 %v505
        %v570 = vcvt.s32.f32 %v506
        %v571 = vcvt.s32.f32 %v507
        %v572 = vcvt.s32.f32 %v508
        %v573 = vcvt.s32.f32 %v509
        %v574 = vcvt.s32.f32 %v510
        %v575 = vcvt.s32.f32 %v511
        %v576 = vcvt.s32.f32 %v512
        %v577 = vcvt.s32.f32 %v513
        %v578 = vcvt.s32.f32 %v514
        %v579 = vcvt.s32.f32 %v515
        %v580 = vcvt.s32.f32 %v516
        %v581 = vcvt.s32.f32 %v517
        %v582 = vcvt.s32.f32 %v518
        %v583 = vcvt.s32.f32 %v519
        %v584 = vcvt.s32.f32 %v520
        %v585 = vcvt.s32.f32 %v521
        %v586 = vcvt.s32.f32 %v522
        %v587 = vcvt.s32.f32 %v523
        %v588 = vcvt.s32.f32 %v524
        %v589 = vcvt.s32.f32 %v525
        %v590 = vcvt.s32.f32 %v526
        %v591 = vcvt.s32.f32 %v527
        %v592 = vcvt.s32.f32 %v528
        %v593 = vcvt.s32.f32 %v529
        %v594 = vcvt.s32.f32 %v530
        %v595 = vpack.c.bf16 %v533, %v531
        %v596 = vpack.c.bf16 %v534, %v532
        %v597 = vpack.c.bf16 %v537, %v535
        %v598 = vpack.c.bf16 %v538, %v536
        %v599 = vpack.c.bf16 %v541, %v539
        %v600 = vpack.c.bf16 %v542, %v540
        %v601 = vpack.c.bf16 %v545, %v543
        %v602 = vpack.c.bf16 %v546, %v544
        %v603 = vpack.c.bf16 %v549, %v547
        %v604 = vpack.c.bf16 %v550, %v548
        %v605 = vpack.c.bf16 %v553, %v551
        %v606 = vpack.c.bf16 %v554, %v552
        %v607 = vpack.c.bf16 %v557, %v555
        %v608 = vpack.c.bf16 %v558, %v556
        %v609 = vpack.c.bf16 %v561, %v559
        %v610 = vpack.c.bf16 %v562, %v560
        %v611 = vpack.c.bf16 %v565, %v563
        %v612 = vpack.c.bf16 %v566, %v564
        %v613 = vpack.c.bf16 %v569, %v567
        %v614 = vpack.c.bf16 %v570, %v568
        %v615 = vpack.c.bf16 %v573, %v571
        %v616 = vpack.c.bf16 %v574, %v572
        %v617 = vpack.c.bf16 %v577, %v575
        %v618 = vpack.c.bf16 %v578, %v576
        %v619 = vpack.c.bf16 %v581, %v579
        %v620 = vpack.c.bf16 %v582, %v580
        %v621 = vpack.c.bf16 %v585, %v583
        %v622 = vpack.c.bf16 %v586, %v584
        %v623 = vpack.c.bf16 %v589, %v587
        %v624 = vpack.c.bf16 %v590, %v588
        %v625 = vpack.c.bf16 %v593, %v591
        %v626 = vpack.c.bf16 %v594, %v592
        %v627 = vld [vmem:[#allocation2] sm:$0xff]
        %v628 = vld [vmem:[#allocation2 + $0x8] sm:$0xff]
        %v629 = vld [vmem:[#allocation2 + $0x10] sm:$0xff]
        %v630 = vld [vmem:[#allocation2 + $0x18] sm:$0xff]
        %v631 = vld [vmem:[#allocation2 + $0x20] sm:$0xff]
        %v632 = vld [vmem:[#allocation2 + $0x28] sm:$0xff]
        %v633 = vld [vmem:[#allocation2 + $0x30] sm:$0xff]
        %v634 = vld [vmem:[#allocation2 + $0x38] sm:$0xff]
        %v635 = vld [vmem:[#allocation2 + $0x40] sm:$0xff]
        %v636 = vld [vmem:[#allocation2 + $0x48] sm:$0xff]
        %v637 = vld [vmem:[#allocation2 + $0x50] sm:$0xff]
        %v638 = vld [vmem:[#allocation2 + $0x58] sm:$0xff]
        %v639 = vld [vmem:[#allocation2 + $0x60] sm:$0xff]
        %v640 = vld [vmem:[#allocation2 + $0x68] sm:$0xff]
        %v641 = vld [vmem:[#allocation2 + $0x70] sm:$0xff]
        %v642 = vld [vmem:[#allocation2 + $0x78] sm:$0xff]
        %v643 = vld [vmem:[#allocation2 + $0x80] sm:$0xff]
        %v644 = vld [vmem:[#allocation2 + $0x88] sm:$0xff]
        %v645 = vld [vmem:[#allocation2 + $0x90] sm:$0xff]
        %v646 = vld [vmem:[#allocation2 + $0x98] sm:$0xff]
        %v647 = vld [vmem:[#allocation2 + $0xa0] sm:$0xff]
        %v648 = vld [vmem:[#allocation2 + $0xa8] sm:$0xff]
        %v649 = vld [vmem:[#allocation2 + $0xb0] sm:$0xff]
        %v650 = vld [vmem:[#allocation2 + $0xb8] sm:$0xff]
        %v651 = vld [vmem:[#allocation2 + $0xc0] sm:$0xff]
        %v652 = vld [vmem:[#allocation2 + $0xc8] sm:$0xff]
        %v653 = vld [vmem:[#allocation2 + $0xd0] sm:$0xff]
        %v654 = vld [vmem:[#allocation2 + $0xd8] sm:$0xff]
        %v655 = vld [vmem:[#allocation2 + $0xe0] sm:$0xff]
        %v656 = vld [vmem:[#allocation2 + $0xe8] sm:$0xff]
        %v657 = vld [vmem:[#allocation2 + $0xf0] sm:$0xff]
        %v658 = vld [vmem:[#allocation2 + $0xf8] sm:$0xff]
        %v659 = vld [vmem:[%s347] sm:$0xf]
        %v660 = vld [vmem:[%s347 + $0x4] sm:$0xf]
        %v661 = vld [vmem:[%s347 + $0x8] sm:$0xf]
        %v662 = vld [vmem:[%s347 + $0xc] sm:$0xf]
        %v663 = vld [vmem:[%s347 + $0x10] sm:$0xf]
        %v664 = vld [vmem:[%s347 + $0x14] sm:$0xf]
        %v665 = vld [vmem:[%s347 + $0x18] sm:$0xf]
        %v666 = vld [vmem:[%s347 + $0x1c] sm:$0xf]
        %v667 = vld [vmem:[%s347 + $0x20] sm:$0xf]
        %v668 = vld [vmem:[%s347 + $0x24] sm:$0xf]
        %v669 = vld [vmem:[%s347 + $0x28] sm:$0xf]
        %v670 = vld [vmem:[%s347 + $0x2c] sm:$0xf]
        %v671 = vld [vmem:[%s347 + $0x30] sm:$0xf]
        %v672 = vld [vmem:[%s347 + $0x34] sm:$0xf]
        %v673 = vld [vmem:[%s347 + $0x38] sm:$0xf]
        %v674 = vld [vmem:[%s347 + $0x3c] sm:$0xf]
        %v675 = vld [vmem:[%s347 + $0x40] sm:$0xf]
        %v676 = vld [vmem:[%s347 + $0x44] sm:$0xf]
        %v677 = vld [vmem:[%s347 + $0x48] sm:$0xf]
        %v678 = vld [vmem:[%s347 + $0x4c] sm:$0xf]
        %v679 = vld [vmem:[%s347 + $0x50] sm:$0xf]
        %v680 = vld [vmem:[%s347 + $0x54] sm:$0xf]
        %v681 = vld [vmem:[%s347 + $0x58] sm:$0xf]
        %v682 = vld [vmem:[%s347 + $0x5c] sm:$0xf]
        %v683 = vld [vmem:[%s347 + $0x60] sm:$0xf]
        %v684 = vld [vmem:[%s347 + $0x64] sm:$0xf]
        %v685 = vld [vmem:[%s347 + $0x68] sm:$0xf]
        %v686 = vld [vmem:[%s347 + $0x6c] sm:$0xf]
        %v687 = vld [vmem:[%s347 + $0x70] sm:$0xf]
        %v688 = vld [vmem:[%s347 + $0x74] sm:$0xf]
        %v689 = vld [vmem:[%s347 + $0x78] sm:$0xf]
        %v690 = vld [vmem:[%s347 + $0x7c] sm:$0xf]
        %v723 = vunpack.c.l.b16 %v659
        %v724 = vunpack.c.l.b16 %v660
        %v725 = vunpack.c.l.b16 %v661
        %v726 = vunpack.c.l.b16 %v662
        %v727 = vunpack.c.l.b16 %v663
        %v728 = vunpack.c.l.b16 %v664
        %v729 = vunpack.c.l.b16 %v665
        %v730 = vunpack.c.l.b16 %v666
        %v731 = vunpack.c.l.b16 %v667
        %v732 = vunpack.c.l.b16 %v668
        %v733 = vunpack.c.l.b16 %v669
        %v734 = vunpack.c.l.b16 %v670
        %v735 = vunpack.c.l.b16 %v671
        %v736 = vunpack.c.l.b16 %v672
        %v737 = vunpack.c.l.b16 %v673
        %v738 = vunpack.c.l.b16 %v674
        %v739 = vunpack.c.l.b16 %v675
        %v740 = vunpack.c.l.b16 %v676
        %v741 = vunpack.c.l.b16 %v677
        %v742 = vunpack.c.l.b16 %v678
        %v743 = vunpack.c.l.b16 %v679
        %v744 = vunpack.c.l.b16 %v680
        %v745 = vunpack.c.l.b16 %v681
        %v746 = vunpack.c.l.b16 %v682
        %v747 = vunpack.c.l.b16 %v683
        %v748 = vunpack.c.l.b16 %v684
        %v749 = vunpack.c.l.b16 %v685
        %v750 = vunpack.c.l.b16 %v686
        %v751 = vunpack.c.l.b16 %v687
        %v752 = vunpack.c.l.b16 %v688
        %v753 = vunpack.c.l.b16 %v689
        %v754 = vunpack.c.l.b16 %v690
        %v755 = vpack.c.b16 %v724, %v723
        %v756 = vpack.c.b16 %v726, %v725
        %v757 = vpack.c.b16 %v728, %v727
        %v758 = vpack.c.b16 %v730, %v729
        %v759 = vpack.c.b16 %v732, %v731
        %v760 = vpack.c.b16 %v734, %v733
        %v761 = vpack.c.b16 %v736, %v735
        %v762 = vpack.c.b16 %v738, %v737
        %v763 = vpack.c.b16 %v740, %v739
        %v764 = vpack.c.b16 %v742, %v741
        %v765 = vpack.c.b16 %v744, %v743
        %v766 = vpack.c.b16 %v746, %v745
        %v767 = vpack.c.b16 %v748, %v747
        %v768 = vpack.c.b16 %v750, %v749
        %v769 = vpack.c.b16 %v752, %v751
        %v770 = vpack.c.b16 %v754, %v753
        %787 = vmatpush.bf16.msra.mxu0 %v762
        %788 = vmatpush.bf16.msra.mxu0 %v761
        %789 = vmatpush.bf16.msra.mxu0 %v760
        %790 = vmatpush.bf16.msra.mxu0 %v759
        %791 = vmatpush.bf16.msra.mxu0 %v758
        %792 = vmatpush.bf16.msra.mxu0 %v757
        %793 = vmatpush.bf16.msra.mxu0 %v756
        %794 = vmatpush.bf16.msra.mxu0 %v755
        %795 = vmatmul.bf16.gmra.mxu0 %v595
        %v796 = vpop.f32.mrf.mxu0
        %v797 = vadd.f32 0.0, %v796
        %v798 = vpop.f32.mrf.mxu0
        %v799 = vadd.f32 0.0, %v798
        %800 = vmatmul.bf16.gmra.mxu0 %v597
        %v801 = vpop.f32.mrf.mxu0
        %v802 = vadd.f32 0.0, %v801
        %v803 = vpop.f32.mrf.mxu0
        %v804 = vadd.f32 0.0, %v803
        %805 = vmatmul.bf16.gmra.mxu0 %v599
        %v806 = vpop.f32.mrf.mxu0
        %v807 = vadd.f32 0.0, %v806
        %v808 = vpop.f32.mrf.mxu0
        %v809 = vadd.f32 0.0, %v808
        %810 = vmatmul.bf16.gmra.mxu0 %v601
        %v811 = vpop.f32.mrf.mxu0
        %v812 = vadd.f32 0.0, %v811
        %v813 = vpop.f32.mrf.mxu0
        %v814 = vadd.f32 0.0, %v813
        %815 = vmatmul.bf16.gmra.mxu0 %v603
        %v816 = vpop.f32.mrf.mxu0
        %v817 = vadd.f32 0.0, %v816
        %v818 = vpop.f32.mrf.mxu0
        %v819 = vadd.f32 0.0, %v818
        %820 = vmatmul.bf16.gmra.mxu0 %v605
        %v821 = vpop.f32.mrf.mxu0
        %v822 = vadd.f32 0.0, %v821
        %v823 = vpop.f32.mrf.mxu0
        %v824 = vadd.f32 0.0, %v823
        %825 = vmatmul.bf16.gmra.mxu0 %v607
        %v826 = vpop.f32.mrf.mxu0
        %v827 = vadd.f32 0.0, %v826
        %v828 = vpop.f32.mrf.mxu0
        %v829 = vadd.f32 0.0, %v828
        %830 = vmatmul.bf16.gmra.mxu0 %v609
        %v831 = vpop.f32.mrf.mxu0
        %v832 = vadd.f32 0.0, %v831
        %v833 = vpop.f32.mrf.mxu0
        %v834 = vadd.f32 0.0, %v833
        %835 = vmatmul.bf16.gmra.mxu0 %v611
        %v836 = vpop.f32.mrf.mxu0
        %v837 = vadd.f32 0.0, %v836
        %v838 = vpop.f32.mrf.mxu0
        %v839 = vadd.f32 0.0, %v838
        %840 = vmatmul.bf16.gmra.mxu0 %v613
        %v841 = vpop.f32.mrf.mxu0
        %v842 = vadd.f32 0.0, %v841
        %v843 = vpop.f32.mrf.mxu0
        %v844 = vadd.f32 0.0, %v843
        %845 = vmatmul.bf16.gmra.mxu0 %v615
        %v846 = vpop.f32.mrf.mxu0
        %v847 = vadd.f32 0.0, %v846
        %v848 = vpop.f32.mrf.mxu0
        %v849 = vadd.f32 0.0, %v848
        %850 = vmatmul.bf16.gmra.mxu0 %v617
        %v851 = vpop.f32.mrf.mxu0
        %v852 = vadd.f32 0.0, %v851
        %v853 = vpop.f32.mrf.mxu0
        %v854 = vadd.f32 0.0, %v853
        %855 = vmatmul.bf16.gmra.mxu0 %v619
        %v856 = vpop.f32.mrf.mxu0
        %v857 = vadd.f32 0.0, %v856
        %v858 = vpop.f32.mrf.mxu0
        %v859 = vadd.f32 0.0, %v858
        %860 = vmatmul.bf16.gmra.mxu0 %v621
        %v861 = vpop.f32.mrf.mxu0
        %v862 = vadd.f32 0.0, %v861
        %v863 = vpop.f32.mrf.mxu0
        %v864 = vadd.f32 0.0, %v863
        %865 = vmatmul.bf16.gmra.mxu0 %v623
        %v866 = vpop.f32.mrf.mxu0
        %v867 = vadd.f32 0.0, %v866
        %v868 = vpop.f32.mrf.mxu0
        %v869 = vadd.f32 0.0, %v868
        %870 = vmatmul.bf16.gmra.mxu0 %v625
        %v871 = vpop.f32.mrf.mxu0
        %v872 = vadd.f32 0.0, %v871
        %v873 = vpop.f32.mrf.mxu0
        %v874 = vadd.f32 0.0, %v873
        %875 = vdwg.mxu0
        %876 = vmatpush.bf16.msra.mxu0 %v770
        %877 = vmatpush.bf16.msra.mxu0 %v769
        %878 = vmatpush.bf16.msra.mxu0 %v768
        %879 = vmatpush.bf16.msra.mxu0 %v767
        %880 = vmatpush.bf16.msra.mxu0 %v766
        %881 = vmatpush.bf16.msra.mxu0 %v765
        %882 = vmatpush.bf16.msra.mxu0 %v764
        %883 = vmatpush.bf16.msra.mxu0 %v763
        %884 = vmatmul.bf16.gmra.mxu0 %v596
        %v885 = vpop.f32.mrf.mxu0
        %v886 = vadd.f32 %v797, %v885
        %v887 = vpop.f32.mrf.mxu0
        %v888 = vadd.f32 %v799, %v887
        %889 = vmatmul.bf16.gmra.mxu0 %v598
        %v890 = vpop.f32.mrf.mxu0
        %v891 = vadd.f32 %v802, %v890
        %v892 = vpop.f32.mrf.mxu0
        %v893 = vadd.f32 %v804, %v892
        %894 = vmatmul.bf16.gmra.mxu0 %v600
        %v895 = vpop.f32.mrf.mxu0
        %v896 = vadd.f32 %v807, %v895
        %v897 = vpop.f32.mrf.mxu0
        %v898 = vadd.f32 %v809, %v897
        %899 = vmatmul.bf16.gmra.mxu0 %v602
        %v900 = vpop.f32.mrf.mxu0
        %v901 = vadd.f32 %v812, %v900
        %v902 = vpop.f32.mrf.mxu0
        %v903 = vadd.f32 %v814, %v902
        %904 = vmatmul.bf16.gmra.mxu0 %v604
        %v905 = vpop.f32.mrf.mxu0
        %v906 = vadd.f32 %v817, %v905
        %v907 = vpop.f32.mrf.mxu0
        %v908 = vadd.f32 %v819, %v907
        %909 = vmatmul.bf16.gmra.mxu0 %v606
        %v910 = vpop.f32.mrf.mxu0
        %v911 = vadd.f32 %v822, %v910
        %v912 = vpop.f32.mrf.mxu0
        %v913 = vadd.f32 %v824, %v912
        %914 = vmatmul.bf16.gmra.mxu0 %v608
        %v915 = vpop.f32.mrf.mxu0
        %v916 = vadd.f32 %v827, %v915
        %v917 = vpop.f32.mrf.mxu0
        %v918 = vadd.f32 %v829, %v917
        %919 = vmatmul.bf16.gmra.mxu0 %v610
        %v920 = vpop.f32.mrf.mxu0
        %v921 = vadd.f32 %v832, %v920
        %v922 = vpop.f32.mrf.mxu0
        %v923 = vadd.f32 %v834, %v922
        %924 = vmatmul.bf16.gmra.mxu0 %v612
        %v925 = vpop.f32.mrf.mxu0
        %v926 = vadd.f32 %v837, %v925
        %v927 = vpop.f32.mrf.mxu0
        %v928 = vadd.f32 %v839, %v927
        %929 = vmatmul.bf16.gmra.mxu0 %v614
        %v930 = vpop.f32.mrf.mxu0
        %v931 = vadd.f32 %v842, %v930
        %v932 = vpop.f32.mrf.mxu0
        %v933 = vadd.f32 %v844, %v932
        %934 = vmatmul.bf16.gmra.mxu0 %v616
        %v935 = vpop.f32.mrf.mxu0
        %v936 = vadd.f32 %v847, %v935
        %v937 = vpop.f32.mrf.mxu0
        %v938 = vadd.f32 %v849, %v937
        %939 = vmatmul.bf16.gmra.mxu0 %v618
        %v940 = vpop.f32.mrf.mxu0
        %v941 = vadd.f32 %v852, %v940
        %v942 = vpop.f32.mrf.mxu0
        %v943 = vadd.f32 %v854, %v942
        %944 = vmatmul.bf16.gmra.mxu0 %v620
        %v945 = vpop.f32.mrf.mxu0
        %v946 = vadd.f32 %v857, %v945
        %v947 = vpop.f32.mrf.mxu0
        %v948 = vadd.f32 %v859, %v947
        %949 = vmatmul.bf16.gmra.mxu0 %v622
        %v950 = vpop.f32.mrf.mxu0
        %v951 = vadd.f32 %v862, %v950
        %v952 = vpop.f32.mrf.mxu0
        %v953 = vadd.f32 %v864, %v952
        %954 = vmatmul.bf16.gmra.mxu0 %v624
        %v955 = vpop.f32.mrf.mxu0
        %v956 = vadd.f32 %v867, %v955
        %v957 = vpop.f32.mrf.mxu0
        %v958 = vadd.f32 %v869, %v957
        %959 = vmatmul.bf16.gmra.mxu0 %v626
        %v960 = vpop.f32.mrf.mxu0
        %v961 = vadd.f32 %v872, %v960
        %v962 = vpop.f32.mrf.mxu0
        %v963 = vadd.f32 %v874, %v962
        %964 = vdwg.mxu0
        %v965 = vadd.f32 %v627, %v886
        %v966 = vadd.f32 %v628, %v888
        %v967 = vadd.f32 %v629, %v891
        %v968 = vadd.f32 %v630, %v893
        %v969 = vadd.f32 %v631, %v896
        %v970 = vadd.f32 %v632, %v898
        %v971 = vadd.f32 %v633, %v901
        %v972 = vadd.f32 %v634, %v903
        %v973 = vadd.f32 %v635, %v906
        %v974 = vadd.f32 %v636, %v908
        %v975 = vadd.f32 %v637, %v911
        %v976 = vadd.f32 %v638, %v913
        %v977 = vadd.f32 %v639, %v916
        %v978 = vadd.f32 %v640, %v918
        %v979 = vadd.f32 %v641, %v921
        %v980 = vadd.f32 %v642, %v923
        %v981 = vadd.f32 %v643, %v926
        %v982 = vadd.f32 %v644, %v928
        %v983 = vadd.f32 %v645, %v931
        %v984 = vadd.f32 %v646, %v933
        %v985 = vadd.f32 %v647, %v936
        %v986 = vadd.f32 %v648, %v938
        %v987 = vadd.f32 %v649, %v941
        %v988 = vadd.f32 %v650, %v943
        %v989 = vadd.f32 %v651, %v946
        %v990 = vadd.f32 %v652, %v948
        %v991 = vadd.f32 %v653, %v951
        %v992 = vadd.f32 %v654, %v953
        %v993 = vadd.f32 %v655, %v956
        %v994 = vadd.f32 %v656, %v958
        %v995 = vadd.f32 %v657, %v961
        %v996 = vadd.f32 %v658, %v963
        %997 = vst [vmem:[#allocation2] sm:$0xff] %v965
        %998 = vst [vmem:[#allocation2 + $0x8] sm:$0xff] %v966
        %999 = vst [vmem:[#allocation2 + $0x10] sm:$0xff] %v967
        %1000 = vst [vmem:[#allocation2 + $0x18] sm:$0xff] %v968
        %1001 = vst [vmem:[#allocation2 + $0x20] sm:$0xff] %v969
        %1002 = vst [vmem:[#allocation2 + $0x28] sm:$0xff] %v970
        %1003 = vst [vmem:[#allocation2 + $0x30] sm:$0xff] %v971
        %1004 = vst [vmem:[#allocation2 + $0x38] sm:$0xff] %v972
        %1005 = vst [vmem:[#allocation2 + $0x40] sm:$0xff] %v973
        %1006 = vst [vmem:[#allocation2 + $0x48] sm:$0xff] %v974
        %1007 = vst [vmem:[#allocation2 + $0x50] sm:$0xff] %v975
        %1008 = vst [vmem:[#allocation2 + $0x58] sm:$0xff] %v976
        %1009 = vst [vmem:[#allocation2 + $0x60] sm:$0xff] %v977
        %1010 = vst [vmem:[#allocation2 + $0x68] sm:$0xff] %v978
        %1011 = vst [vmem:[#allocation2 + $0x70] sm:$0xff] %v979
        %1012 = vst [vmem:[#allocation2 + $0x78] sm:$0xff] %v980
        %1013 = vst [vmem:[#allocation2 + $0x80] sm:$0xff] %v981
        %1014 = vst [vmem:[#allocation2 + $0x88] sm:$0xff] %v982
        %1015 = vst [vmem:[#allocation2 + $0x90] sm:$0xff] %v983
        %1016 = vst [vmem:[#allocation2 + $0x98] sm:$0xff] %v984
        %1017 = vst [vmem:[#allocation2 + $0xa0] sm:$0xff] %v985
        %1018 = vst [vmem:[#allocation2 + $0xa8] sm:$0xff] %v986
        %1019 = vst [vmem:[#allocation2 + $0xb0] sm:$0xff] %v987
        %1020 = vst [vmem:[#allocation2 + $0xb8] sm:$0xff] %v988
        %1021 = vst [vmem:[#allocation2 + $0xc0] sm:$0xff] %v989
        %1022 = vst [vmem:[#allocation2 + $0xc8] sm:$0xff] %v990
        %1023 = vst [vmem:[#allocation2 + $0xd0] sm:$0xff] %v991
        %1024 = vst [vmem:[#allocation2 + $0xd8] sm:$0xff] %v992
        %1025 = vst [vmem:[#allocation2 + $0xe0] sm:$0xff] %v993
        %1026 = vst [vmem:[#allocation2 + $0xe8] sm:$0xff] %v994
        %1027 = vst [vmem:[#allocation2 + $0xf0] sm:$0xff] %v995
        %1028 = vst [vmem:[#allocation2 + $0xf8] sm:$0xff] %v996
        %p1029 = scmp.eq.s32.totalorder %s28, 1
        // Predicated region
        $region80: #{tpu_custom_call.1} parent=58 // pred_check
          %p1030 = pneg %p1029
        $region81: #{tpu_custom_call.1} parent=58 // pred_check_branch
          %1032 = sbr.rel (%p1030) target = $region83
        $region82: #{tpu_custom_call.1} parent=58 // pred_region
          %v1033 = vld [vmem:[#allocation2] sm:$0xff]
          %v1034 = vld [vmem:[#allocation2 + $0x8] sm:$0xff]
          %v1035 = vld [vmem:[#allocation2 + $0x10] sm:$0xff]
          %v1036 = vld [vmem:[#allocation2 + $0x18] sm:$0xff]
          %v1037 = vld [vmem:[#allocation2 + $0x20] sm:$0xff]
          %v1038 = vld [vmem:[#allocation2 + $0x28] sm:$0xff]
          %v1039 = vld [vmem:[#allocation2 + $0x30] sm:$0xff]
          %v1040 = vld [vmem:[#allocation2 + $0x38] sm:$0xff]
          %v1041 = vld [vmem:[#allocation2 + $0x40] sm:$0xff]
          %v1042 = vld [vmem:[#allocation2 + $0x48] sm:$0xff]
          %v1043 = vld [vmem:[#allocation2 + $0x50] sm:$0xff]
          %v1044 = vld [vmem:[#allocation2 + $0x58] sm:$0xff]
          %v1045 = vld [vmem:[#allocation2 + $0x60] sm:$0xff]
          %v1046 = vld [vmem:[#allocation2 + $0x68] sm:$0xff]
          %v1047 = vld [vmem:[#allocation2 + $0x70] sm:$0xff]
          %v1048 = vld [vmem:[#allocation2 + $0x78] sm:$0xff]
          %v1049 = vld [vmem:[#allocation2 + $0x80] sm:$0xff]
          %v1050 = vld [vmem:[#allocation2 + $0x88] sm:$0xff]
          %v1051 = vld [vmem:[#allocation2 + $0x90] sm:$0xff]
          %v1052 = vld [vmem:[#allocation2 + $0x98] sm:$0xff]
          %v1053 = vld [vmem:[#allocation2 + $0xa0] sm:$0xff]
          %v1054 = vld [vmem:[#allocation2 + $0xa8] sm:$0xff]
          %v1055 = vld [vmem:[#allocation2 + $0xb0] sm:$0xff]
          %v1056 = vld [vmem:[#allocation2 + $0xb8] sm:$0xff]
          %v1057 = vld [vmem:[#allocation2 + $0xc0] sm:$0xff]
          %v1058 = vld [vmem:[#allocation2 + $0xc8] sm:$0xff]
          %v1059 = vld [vmem:[#allocation2 + $0xd0] sm:$0xff]
          %v1060 = vld [vmem:[#allocation2 + $0xd8] sm:$0xff]
          %v1061 = vld [vmem:[#allocation2 + $0xe0] sm:$0xff]
          %v1062 = vld [vmem:[#allocation2 + $0xe8] sm:$0xff]
          %v1063 = vld [vmem:[#allocation2 + $0xf0] sm:$0xff]
          %v1064 = vld [vmem:[#allocation2 + $0xf8] sm:$0xff]
          %v1065 = vld [vmem:[%s411] sm:$0xff]
          %v1066 = vld [vmem:[%s411 + $0x8] sm:$0xff]
          %v1067 = vld [vmem:[%s411 + $0x10] sm:$0xff]
          %v1068 = vld [vmem:[%s411 + $0x18] sm:$0xff]
          %v1069 = vld [vmem:[%s411 + $0x20] sm:$0xff]
          %v1070 = vld [vmem:[%s411 + $0x28] sm:$0xff]
          %v1071 = vld [vmem:[%s411 + $0x30] sm:$0xff]
          %v1072 = vld [vmem:[%s411 + $0x38] sm:$0xff]
          %v1073 = vld [vmem:[%s411 + $0x40] sm:$0xff]
          %v1074 = vld [vmem:[%s411 + $0x48] sm:$0xff]
          %v1075 = vld [vmem:[%s411 + $0x50] sm:$0xff]
          %v1076 = vld [vmem:[%s411 + $0x58] sm:$0xff]
          %v1077 = vld [vmem:[%s411 + $0x60] sm:$0xff]
          %v1078 = vld [vmem:[%s411 + $0x68] sm:$0xff]
          %v1079 = vld [vmem:[%s411 + $0x70] sm:$0xff]
          %v1080 = vld [vmem:[%s411 + $0x78] sm:$0xff]
          %v1081 = vld [vmem:[%s411 + $0x80] sm:$0xff]
          %v1082 = vld [vmem:[%s411 + $0x88] sm:$0xff]
          %v1083 = vld [vmem:[%s411 + $0x90] sm:$0xff]
          %v1084 = vld [vmem:[%s411 + $0x98] sm:$0xff]
          %v1085 = vld [vmem:[%s411 + $0xa0] sm:$0xff]
          %v1086 = vld [vmem:[%s411 + $0xa8] sm:$0xff]
          %v1087 = vld [vmem:[%s411 + $0xb0] sm:$0xff]
          %v1088 = vld [vmem:[%s411 + $0xb8] sm:$0xff]
          %v1089 = vld [vmem:[%s411 + $0xc0] sm:$0xff]
          %v1090 = vld [vmem:[%s411 + $0xc8] sm:$0xff]
          %v1091 = vld [vmem:[%s411 + $0xd0] sm:$0xff]
          %v1092 = vld [vmem:[%s411 + $0xd8] sm:$0xff]
          %v1093 = vld [vmem:[%s411 + $0xe0] sm:$0xff]
          %v1094 = vld [vmem:[%s411 + $0xe8] sm:$0xff]
          %v1095 = vld [vmem:[%s411 + $0xf0] sm:$0xff]
          %v1096 = vld [vmem:[%s411 + $0xf8] sm:$0xff]
          %1098 = vset.pattern.permute.xlu0 0
          %1099 = vperm.xlu0 %1098, %v1065
          %v1100 = vpop.permute.xlu0 %1099
          %1103 = vset.pattern.permute.xlu0 0
          %1104 = vperm.xlu0 %1103, %v1066
          %v1105 = vpop.permute.xlu0 %1104
          %1108 = vset.pattern.permute.xlu0 0
          %1109 = vperm.xlu0 %1108, %v1067
          %v1110 = vpop.permute.xlu0 %1109
          %1113 = vset.pattern.permute.xlu0 0
          %1114 = vperm.xlu0 %1113, %v1068
          %v1115 = vpop.permute.xlu0 %1114
          %1118 = vset.pattern.permute.xlu0 0
          %1119 = vperm.xlu0 %1118, %v1069
          %v1120 = vpop.permute.xlu0 %1119
          %1123 = vset.pattern.permute.xlu0 0
          %1124 = vperm.xlu0 %1123, %v1070
          %v1125 = vpop.permute.xlu0 %1124
          %1128 = vset.pattern.permute.xlu0 0
          %1129 = vperm.xlu0 %1128, %v1071
          %v1130 = vpop.permute.xlu0 %1129
          %1133 = vset.pattern.permute.xlu0 0
          %1134 = vperm.xlu0 %1133, %v1072
          %v1135 = vpop.permute.xlu0 %1134
          %1138 = vset.pattern.permute.xlu0 0
          %1139 = vperm.xlu0 %1138, %v1073
          %v1140 = vpop.permute.xlu0 %1139
          %1143 = vset.pattern.permute.xlu0 0
          %1144 = vperm.xlu0 %1143, %v1074
          %v1145 = vpop.permute.xlu0 %1144
          %1148 = vset.pattern.permute.xlu0 0
          %1149 = vperm.xlu0 %1148, %v1075
          %v1150 = vpop.permute.xlu0 %1149
          %1153 = vset.pattern.permute.xlu0 0
          %1154 = vperm.xlu0 %1153, %v1076
          %v1155 = vpop.permute.xlu0 %1154
          %1158 = vset.pattern.permute.xlu0 0
          %1159 = vperm.xlu0 %1158, %v1077
          %v1160 = vpop.permute.xlu0 %1159
          %1163 = vset.pattern.permute.xlu0 0
          %1164 = vperm.xlu0 %1163, %v1078
          %v1165 = vpop.permute.xlu0 %1164
          %1168 = vset.pattern.permute.xlu0 0
          %1169 = vperm.xlu0 %1168, %v1079
          %v1170 = vpop.permute.xlu0 %1169
          %1173 = vset.pattern.permute.xlu0 0
          %1174 = vperm.xlu0 %1173, %v1080
          %v1175 = vpop.permute.xlu0 %1174
          %1178 = vset.pattern.permute.xlu0 0
          %1179 = vperm.xlu0 %1178, %v1081
          %v1180 = vpop.permute.xlu0 %1179
          %1183 = vset.pattern.permute.xlu0 0
          %1184 = vperm.xlu0 %1183, %v1082
          %v1185 = vpop.permute.xlu0 %1184
          %1188 = vset.pattern.permute.xlu0 0
          %1189 = vperm.xlu0 %1188, %v1083
          %v1190 = vpop.permute.xlu0 %1189
          %1193 = vset.pattern.permute.xlu0 0
          %1194 = vperm.xlu0 %1193, %v1084
          %v1195 = vpop.permute.xlu0 %1194
          %1198 = vset.pattern.permute.xlu0 0
          %1199 = vperm.xlu0 %1198, %v1085
          %v1200 = vpop.permute.xlu0 %1199
          %1203 = vset.pattern.permute.xlu0 0
          %1204 = vperm.xlu0 %1203, %v1086
          %v1205 = vpop.permute.xlu0 %1204
          %1208 = vset.pattern.permute.xlu0 0
          %1209 = vperm.xlu0 %1208, %v1087
          %v1210 = vpop.permute.xlu0 %1209
          %1213 = vset.pattern.permute.xlu0 0
          %1214 = vperm.xlu0 %1213, %v1088
          %v1215 = vpop.permute.xlu0 %1214
          %1218 = vset.pattern.permute.xlu0 0
          %1219 = vperm.xlu0 %1218, %v1089
          %v1220 = vpop.permute.xlu0 %1219
          %1223 = vset.pattern.permute.xlu0 0
          %1224 = vperm.xlu0 %1223, %v1090
          %v1225 = vpop.permute.xlu0 %1224
          %1228 = vset.pattern.permute.xlu0 0
          %1229 = vperm.xlu0 %1228, %v1091
          %v1230 = vpop.permute.xlu0 %1229
          %1233 = vset.pattern.permute.xlu0 0
          %1234 = vperm.xlu0 %1233, %v1092
          %v1235 = vpop.permute.xlu0 %1234
          %1238 = vset.pattern.permute.xlu0 0
          %1239 = vperm.xlu0 %1238, %v1093
          %v1240 = vpop.permute.xlu0 %1239
          %1243 = vset.pattern.permute.xlu0 0
          %1244 = vperm.xlu0 %1243, %v1094
          %v1245 = vpop.permute.xlu0 %1244
          %1248 = vset.pattern.permute.xlu0 0
          %1249 = vperm.xlu0 %1248, %v1095
          %v1250 = vpop.permute.xlu0 %1249
          %1253 = vset.pattern.permute.xlu0 0
          %1254 = vperm.xlu0 %1253, %v1096
          %v1255 = vpop.permute.xlu0 %1254
          %v1257 = vmul.f32 %v1033, %v1100
          %v1258 = vmul.f32 %v1034, %v1105
          %v1259 = vmul.f32 %v1035, %v1110
          %v1260 = vmul.f32 %v1036, %v1115
          %v1261 = vmul.f32 %v1037, %v1120
          %v1262 = vmul.f32 %v1038, %v1125
          %v1263 = vmul.f32 %v1039, %v1130
          %v1264 = vmul.f32 %v1040, %v1135
          %v1265 = vmul.f32 %v1041, %v1140
          %v1266 = vmul.f32 %v1042, %v1145
          %v1267 = vmul.f32 %v1043, %v1150
          %v1268 = vmul.f32 %v1044, %v1155
          %v1269 = vmul.f32 %v1045, %v1160
          %v1270 = vmul.f32 %v1046, %v1165
          %v1271 = vmul.f32 %v1047, %v1170
          %v1272 = vmul.f32 %v1048, %v1175
          %v1273 = vmul.f32 %v1049, %v1180
          %v1274 = vmul.f32 %v1050, %v1185
          %v1275 = vmul.f32 %v1051, %v1190
          %v1276 = vmul.f32 %v1052, %v1195
          %v1277 = vmul.f32 %v1053, %v1200
          %v1278 = vmul.f32 %v1054, %v1205
          %v1279 = vmul.f32 %v1055, %v1210
          %v1280 = vmul.f32 %v1056, %v1215
          %v1281 = vmul.f32 %v1057, %v1220
          %v1282 = vmul.f32 %v1058, %v1225
          %v1283 = vmul.f32 %v1059, %v1230
          %v1284 = vmul.f32 %v1060, %v1235
          %v1285 = vmul.f32 %v1061, %v1240
          %v1286 = vmul.f32 %v1062, %v1245
          %v1287 = vmul.f32 %v1063, %v1250
          %v1288 = vmul.f32 %v1064, %v1255
          %v1289 = vpack.c.bf16 %v1258, %v1257
          %v1290 = vpack.c.bf16 %v1260, %v1259
          %v1291 = vpack.c.bf16 %v1262, %v1261
          %v1292 = vpack.c.bf16 %v1264, %v1263
          %v1293 = vpack.c.bf16 %v1266, %v1265
          %v1294 = vpack.c.bf16 %v1268, %v1267
          %v1295 = vpack.c.bf16 %v1270, %v1269
          %v1296 = vpack.c.bf16 %v1272, %v1271
          %v1297 = vpack.c.bf16 %v1274, %v1273
          %v1298 = vpack.c.bf16 %v1276, %v1275
          %v1299 = vpack.c.bf16 %v1278, %v1277
          %v1300 = vpack.c.bf16 %v1280, %v1279
          %v1301 = vpack.c.bf16 %v1282, %v1281
          %v1302 = vpack.c.bf16 %v1284, %v1283
          %v1303 = vpack.c.bf16 %v1286, %v1285
          %v1304 = vpack.c.bf16 %v1288, %v1287
          %v1305 = vld [vmem:[#allocation7] sm:$0xf]
          %v1306 = vld [vmem:[#allocation7 + $0x4] sm:$0xf]
          %v1307 = vld [vmem:[#allocation7 + $0x8] sm:$0xf]
          %v1308 = vld [vmem:[#allocation7 + $0xc] sm:$0xf]
          %v1309 = vld [vmem:[#allocation7 + $0x10] sm:$0xf]
          %v1310 = vld [vmem:[#allocation7 + $0x14] sm:$0xf]
          %v1311 = vld [vmem:[#allocation7 + $0x18] sm:$0xf]
          %v1312 = vld [vmem:[#allocation7 + $0x1c] sm:$0xf]
          %v1313 = vld [vmem:[#allocation7 + $0x20] sm:$0xf]
          %v1314 = vld [vmem:[#allocation7 + $0x24] sm:$0xf]
          %v1315 = vld [vmem:[#allocation7 + $0x28] sm:$0xf]
          %v1316 = vld [vmem:[#allocation7 + $0x2c] sm:$0xf]
          %v1317 = vld [vmem:[#allocation7 + $0x30] sm:$0xf]
          %v1318 = vld [vmem:[#allocation7 + $0x34] sm:$0xf]
          %v1319 = vld [vmem:[#allocation7 + $0x38] sm:$0xf]
          %v1320 = vld [vmem:[#allocation7 + $0x3c] sm:$0xf]
          %v1337 = vunpack.c.l.b16 %v1305
          %v1338 = vunpack.c.l.b16 %v1306
          %v1339 = vunpack.c.l.b16 %v1307
          %v1340 = vunpack.c.l.b16 %v1308
          %v1341 = vunpack.c.l.b16 %v1309
          %v1342 = vunpack.c.l.b16 %v1310
          %v1343 = vunpack.c.l.b16 %v1311
          %v1344 = vunpack.c.l.b16 %v1312
          %v1345 = vunpack.c.l.b16 %v1313
          %v1346 = vunpack.c.l.b16 %v1314
          %v1347 = vunpack.c.l.b16 %v1315
          %v1348 = vunpack.c.l.b16 %v1316
          %v1349 = vunpack.c.l.b16 %v1317
          %v1350 = vunpack.c.l.b16 %v1318
          %v1351 = vunpack.c.l.b16 %v1319
          %v1352 = vunpack.c.l.b16 %v1320
          %v1353 = vpack.c.b16 %v1338, %v1337
          %v1354 = vpack.c.b16 %v1340, %v1339
          %v1355 = vpack.c.b16 %v1342, %v1341
          %v1356 = vpack.c.b16 %v1344, %v1343
          %v1357 = vpack.c.b16 %v1346, %v1345
          %v1358 = vpack.c.b16 %v1348, %v1347
          %v1359 = vpack.c.b16 %v1350, %v1349
          %v1360 = vpack.c.b16 %v1352, %v1351
          %1369 = vmatpush.bf16.msra.mxu0 %v1360
          %1370 = vmatpush.bf16.msra.mxu0 %v1359
          %1371 = vmatpush.bf16.msra.mxu0 %v1358
          %1372 = vmatpush.bf16.msra.mxu0 %v1357
          %1373 = vmatpush.bf16.msra.mxu0 %v1356
          %1374 = vmatpush.bf16.msra.mxu0 %v1355
          %1375 = vmatpush.bf16.msra.mxu0 %v1354
          %1376 = vmatpush.bf16.msra.mxu0 %v1353
          %1377 = vmatmul.bf16.gmra.mxu0 %v1289
          %v1378 = vpop.f32.mrf.mxu0
          %v1379 = vadd.f32 0.0, %v1378
          %v1380 = vpop.f32.mrf.mxu0
          %v1381 = vadd.f32 0.0, %v1380
          %1382 = vmatmul.bf16.gmra.mxu0 %v1290
          %v1383 = vpop.f32.mrf.mxu0
          %v1384 = vadd.f32 0.0, %v1383
          %v1385 = vpop.f32.mrf.mxu0
          %v1386 = vadd.f32 0.0, %v1385
          %1387 = vmatmul.bf16.gmra.mxu0 %v1291
          %v1388 = vpop.f32.mrf.mxu0
          %v1389 = vadd.f32 0.0, %v1388
          %v1390 = vpop.f32.mrf.mxu0
          %v1391 = vadd.f32 0.0, %v1390
          %1392 = vmatmul.bf16.gmra.mxu0 %v1292
          %v1393 = vpop.f32.mrf.mxu0
          %v1394 = vadd.f32 0.0, %v1393
          %v1395 = vpop.f32.mrf.mxu0
          %v1396 = vadd.f32 0.0, %v1395
          %1397 = vmatmul.bf16.gmra.mxu0 %v1293
          %v1398 = vpop.f32.mrf.mxu0
          %v1399 = vadd.f32 0.0, %v1398
          %v1400 = vpop.f32.mrf.mxu0
          %v1401 = vadd.f32 0.0, %v1400
          %1402 = vmatmul.bf16.gmra.mxu0 %v1294
          %v1403 = vpop.f32.mrf.mxu0
          %v1404 = vadd.f32 0.0, %v1403
          %v1405 = vpop.f32.mrf.mxu0
          %v1406 = vadd.f32 0.0, %v1405
          %1407 = vmatmul.bf16.gmra.mxu0 %v1295
          %v1408 = vpop.f32.mrf.mxu0
          %v1409 = vadd.f32 0.0, %v1408
          %v1410 = vpop.f32.mrf.mxu0
          %v1411 = vadd.f32 0.0, %v1410
          %1412 = vmatmul.bf16.gmra.mxu0 %v1296
          %v1413 = vpop.f32.mrf.mxu0
          %v1414 = vadd.f32 0.0, %v1413
          %v1415 = vpop.f32.mrf.mxu0
          %v1416 = vadd.f32 0.0, %v1415
          %1417 = vmatmul.bf16.gmra.mxu0 %v1297
          %v1418 = vpop.f32.mrf.mxu0
          %v1419 = vadd.f32 0.0, %v1418
          %v1420 = vpop.f32.mrf.mxu0
          %v1421 = vadd.f32 0.0, %v1420
          %1422 = vmatmul.bf16.gmra.mxu0 %v1298
          %v1423 = vpop.f32.mrf.mxu0
          %v1424 = vadd.f32 0.0, %v1423
          %v1425 = vpop.f32.mrf.mxu0
          %v1426 = vadd.f32 0.0, %v1425
          %1427 = vmatmul.bf16.gmra.mxu0 %v1299
          %v1428 = vpop.f32.mrf.mxu0
          %v1429 = vadd.f32 0.0, %v1428
          %v1430 = vpop.f32.mrf.mxu0
          %v1431 = vadd.f32 0.0, %v1430
          %1432 = vmatmul.bf16.gmra.mxu0 %v1300
          %v1433 = vpop.f32.mrf.mxu0
          %v1434 = vadd.f32 0.0, %v1433
          %v1435 = vpop.f32.mrf.mxu0
          %v1436 = vadd.f32 0.0, %v1435
          %1437 = vmatmul.bf16.gmra.mxu0 %v1301
          %v1438 = vpop.f32.mrf.mxu0
          %v1439 = vadd.f32 0.0, %v1438
          %v1440 = vpop.f32.mrf.mxu0
          %v1441 = vadd.f32 0.0, %v1440
          %1442 = vmatmul.bf16.gmra.mxu0 %v1302
          %v1443 = vpop.f32.mrf.mxu0
          %v1444 = vadd.f32 0.0, %v1443
          %v1445 = vpop.f32.mrf.mxu0
          %v1446 = vadd.f32 0.0, %v1445
          %1447 = vmatmul.bf16.gmra.mxu0 %v1303
          %v1448 = vpop.f32.mrf.mxu0
          %v1449 = vadd.f32 0.0, %v1448
          %v1450 = vpop.f32.mrf.mxu0
          %v1451 = vadd.f32 0.0, %v1450
          %1452 = vmatmul.bf16.gmra.mxu0 %v1304
          %v1453 = vpop.f32.mrf.mxu0
          %v1454 = vadd.f32 0.0, %v1453
          %v1455 = vpop.f32.mrf.mxu0
          %v1456 = vadd.f32 0.0, %v1455
          %1457 = vdwg.mxu0
          %v1458 = vmax.f32 %v1379, 0.0
          %v1459 = vmax.f32 %v1381, 0.0
          %v1460 = vmax.f32 %v1384, 0.0
          %v1461 = vmax.f32 %v1386, 0.0
          %v1462 = vmax.f32 %v1389, 0.0
          %v1463 = vmax.f32 %v1391, 0.0
          %v1464 = vmax.f32 %v1394, 0.0
          %v1465 = vmax.f32 %v1396, 0.0
          %v1466 = vmax.f32 %v1399, 0.0
          %v1467 = vmax.f32 %v1401, 0.0
          %v1468 = vmax.f32 %v1404, 0.0
          %v1469 = vmax.f32 %v1406, 0.0
          %v1470 = vmax.f32 %v1409, 0.0
          %v1471 = vmax.f32 %v1411, 0.0
          %v1472 = vmax.f32 %v1414, 0.0
          %v1473 = vmax.f32 %v1416, 0.0
          %v1474 = vmax.f32 %v1419, 0.0
          %v1475 = vmax.f32 %v1421, 0.0
          %v1476 = vmax.f32 %v1424, 0.0
          %v1477 = vmax.f32 %v1426, 0.0
          %v1478 = vmax.f32 %v1429, 0.0
          %v1479 = vmax.f32 %v1431, 0.0
          %v1480 = vmax.f32 %v1434, 0.0
          %v1481 = vmax.f32 %v1436, 0.0
          %v1482 = vmax.f32 %v1439, 0.0
          %v1483 = vmax.f32 %v1441, 0.0
          %v1484 = vmax.f32 %v1444, 0.0
          %v1485 = vmax.f32 %v1446, 0.0
          %v1486 = vmax.f32 %v1449, 0.0
          %v1487 = vmax.f32 %v1451, 0.0
          %v1488 = vmax.f32 %v1454, 0.0
          %v1489 = vmax.f32 %v1456, 0.0
          %v1490 = vld [vmem:[%s362] sm:$0xf]
          %v1491 = vld [vmem:[%s362 + $0x4] sm:$0xf]
          %v1492 = vld [vmem:[%s362 + $0x8] sm:$0xf]
          %v1493 = vld [vmem:[%s362 + $0xc] sm:$0xf]
          %v1494 = vld [vmem:[%s362 + $0x10] sm:$0xf]
          %v1495 = vld [vmem:[%s362 + $0x14] sm:$0xf]
          %v1496 = vld [vmem:[%s362 + $0x18] sm:$0xf]
          %v1497 = vld [vmem:[%s362 + $0x1c] sm:$0xf]
          %v1498 = vld [vmem:[%s362 + $0x20] sm:$0xf]
          %v1499 = vld [vmem:[%s362 + $0x24] sm:$0xf]
          %v1500 = vld [vmem:[%s362 + $0x28] sm:$0xf]
          %v1501 = vld [vmem:[%s362 + $0x2c] sm:$0xf]
          %v1502 = vld [vmem:[%s362 + $0x30] sm:$0xf]
          %v1503 = vld [vmem:[%s362 + $0x34] sm:$0xf]
          %v1504 = vld [vmem:[%s362 + $0x38] sm:$0xf]
          %v1505 = vld [vmem:[%s362 + $0x3c] sm:$0xf]
          %v1506 = vld [vmem:[%s362 + $0x40] sm:$0xf]
          %v1507 = vld [vmem:[%s362 + $0x44] sm:$0xf]
          %v1508 = vld [vmem:[%s362 + $0x48] sm:$0xf]
          %v1509 = vld [vmem:[%s362 + $0x4c] sm:$0xf]
          %v1510 = vld [vmem:[%s362 + $0x50] sm:$0xf]
          %v1511 = vld [vmem:[%s362 + $0x54] sm:$0xf]
          %v1512 = vld [vmem:[%s362 + $0x58] sm:$0xf]
          %v1513 = vld [vmem:[%s362 + $0x5c] sm:$0xf]
          %v1514 = vld [vmem:[%s362 + $0x60] sm:$0xf]
          %v1515 = vld [vmem:[%s362 + $0x64] sm:$0xf]
          %v1516 = vld [vmem:[%s362 + $0x68] sm:$0xf]
          %v1517 = vld [vmem:[%s362 + $0x6c] sm:$0xf]
          %v1518 = vld [vmem:[%s362 + $0x70] sm:$0xf]
          %v1519 = vld [vmem:[%s362 + $0x74] sm:$0xf]
          %v1520 = vld [vmem:[%s362 + $0x78] sm:$0xf]
          %v1521 = vld [vmem:[%s362 + $0x7c] sm:$0xf]
          %v1522 = vunpack.c.l.bf16 %v1490
          %v1523 = vunpack.c.l.bf16 %v1491
          %v1524 = vunpack.c.l.bf16 %v1492
          %v1525 = vunpack.c.l.bf16 %v1493
          %v1526 = vunpack.c.l.bf16 %v1494
          %v1527 = vunpack.c.l.bf16 %v1495
          %v1528 = vunpack.c.l.bf16 %v1496
          %v1529 = vunpack.c.l.bf16 %v1497
          %v1530 = vunpack.c.l.bf16 %v1498
          %v1531 = vunpack.c.l.bf16 %v1499
          %v1532 = vunpack.c.l.bf16 %v1500
          %v1533 = vunpack.c.l.bf16 %v1501
          %v1534 = vunpack.c.l.bf16 %v1502
          %v1535 = vunpack.c.l.bf16 %v1503
          %v1536 = vunpack.c.l.bf16 %v1504
          %v1537 = vunpack.c.l.bf16 %v1505
          %v1538 = vunpack.c.l.bf16 %v1506
          %v1539 = vunpack.c.l.bf16 %v1507
          %v1540 = vunpack.c.l.bf16 %v1508
          %v1541 = vunpack.c.l.bf16 %v1509
          %v1542 = vunpack.c.l.bf16 %v1510
          %v1543 = vunpack.c.l.bf16 %v1511
          %v1544 = vunpack.c.l.bf16 %v1512
          %v1545 = vunpack.c.l.bf16 %v1513
          %v1546 = vunpack.c.l.bf16 %v1514
          %v1547 = vunpack.c.l.bf16 %v1515
          %v1548 = vunpack.c.l.bf16 %v1516
          %v1549 = vunpack.c.l.bf16 %v1517
          %v1550 = vunpack.c.l.bf16 %v1518
          %v1551 = vunpack.c.l.bf16 %v1519
          %v1552 = vunpack.c.l.bf16 %v1520
          %v1553 = vunpack.c.l.bf16 %v1521
          %v1554 = vmul.f32 %v1458, %v1522
          %v1555 = vmul.f32 %v1459, %v1523
          %v1556 = vmul.f32 %v1460, %v1524
          %v1557 = vmul.f32 %v1461, %v1525
          %v1558 = vmul.f32 %v1462, %v1526
          %v1559 = vmul.f32 %v1463, %v1527
          %v1560 = vmul.f32 %v1464, %v1528
          %v1561 = vmul.f32 %v1465, %v1529
          %v1562 = vmul.f32 %v1466, %v1530
          %v1563 = vmul.f32 %v1467, %v1531
          %v1564 = vmul.f32 %v1468, %v1532
          %v1565 = vmul.f32 %v1469, %v1533
          %v1566 = vmul.f32 %v1470, %v1534
          %v1567 = vmul.f32 %v1471, %v1535
          %v1568 = vmul.f32 %v1472, %v1536
          %v1569 = vmul.f32 %v1473, %v1537
          %v1570 = vmul.f32 %v1474, %v1538
          %v1571 = vmul.f32 %v1475, %v1539
          %v1572 = vmul.f32 %v1476, %v1540
          %v1573 = vmul.f32 %v1477, %v1541
          %v1574 = vmul.f32 %v1478, %v1542
          %v1575 = vmul.f32 %v1479, %v1543
          %v1576 = vmul.f32 %v1480, %v1544
          %v1577 = vmul.f32 %v1481, %v1545
          %v1578 = vmul.f32 %v1482, %v1546
          %v1579 = vmul.f32 %v1483, %v1547
          %v1580 = vmul.f32 %v1484, %v1548
          %v1581 = vmul.f32 %v1485, %v1549
          %v1582 = vmul.f32 %v1486, %v1550
          %v1583 = vmul.f32 %v1487, %v1551
          %v1584 = vmul.f32 %v1488, %v1552
          %v1585 = vmul.f32 %v1489, %v1553
          %v1586 = vpack.c.bf16 %v1554, %v1554
          %v1587 = vpack.c.bf16 %v1555, %v1555
          %v1588 = vpack.c.bf16 %v1556, %v1556
          %v1589 = vpack.c.bf16 %v1557, %v1557
          %v1590 = vpack.c.bf16 %v1558, %v1558
          %v1591 = vpack.c.bf16 %v1559, %v1559
          %v1592 = vpack.c.bf16 %v1560, %v1560
          %v1593 = vpack.c.bf16 %v1561, %v1561
          %v1594 = vpack.c.bf16 %v1562, %v1562
          %v1595 = vpack.c.bf16 %v1563, %v1563
          %v1596 = vpack.c.bf16 %v1564, %v1564
          %v1597 = vpack.c.bf16 %v1565, %v1565
          %v1598 = vpack.c.bf16 %v1566, %v1566
          %v1599 = vpack.c.bf16 %v1567, %v1567
          %v1600 = vpack.c.bf16 %v1568, %v1568
          %v1601 = vpack.c.bf16 %v1569, %v1569
          %v1602 = vpack.c.bf16 %v1570, %v1570
          %v1603 = vpack.c.bf16 %v1571, %v1571
          %v1604 = vpack.c.bf16 %v1572, %v1572
          %v1605 = vpack.c.bf16 %v1573, %v1573
          %v1606 = vpack.c.bf16 %v1574, %v1574
          %v1607 = vpack.c.bf16 %v1575, %v1575
          %v1608 = vpack.c.bf16 %v1576, %v1576
          %v1609 = vpack.c.bf16 %v1577, %v1577
          %v1610 = vpack.c.bf16 %v1578, %v1578
          %v1611 = vpack.c.bf16 %v1579, %v1579
          %v1612 = vpack.c.bf16 %v1580, %v1580
          %v1613 = vpack.c.bf16 %v1581, %v1581
          %v1614 = vpack.c.bf16 %v1582, %v1582
          %v1615 = vpack.c.bf16 %v1583, %v1583
          %v1616 = vpack.c.bf16 %v1584, %v1584
          %v1617 = vpack.c.bf16 %v1585, %v1585
          %1618 = vst [vmem:[%s403] sm:$0xf] %v1586
          %1619 = vst [vmem:[%s403 + $0x4] sm:$0xf] %v1587
          %1620 = vst [vmem:[%s403 + $0x8] sm:$0xf] %v1588
          %1621 = vst [vmem:[%s403 + $0xc] sm:$0xf] %v1589
          %1622 = vst [vmem:[%s403 + $0x10] sm:$0xf] %v1590
          %1623 = vst [vmem:[%s403 + $0x14] sm:$0xf] %v1591
          %1624 = vst [vmem:[%s403 + $0x18] sm:$0xf] %v1592
          %1625 = vst [vmem:[%s403 + $0x1c] sm:$0xf] %v1593
          %1626 = vst [vmem:[%s403 + $0x20] sm:$0xf] %v1594
          %1627 = vst [vmem:[%s403 + $0x24] sm:$0xf] %v1595
          %1628 = vst [vmem:[%s403 + $0x28] sm:$0xf] %v1596
          %1629 = vst [vmem:[%s403 + $0x2c] sm:$0xf] %v1597
          %1630 = vst [vmem:[%s403 + $0x30] sm:$0xf] %v1598
          %1631 = vst [vmem:[%s403 + $0x34] sm:$0xf] %v1599
          %1632 = vst [vmem:[%s403 + $0x38] sm:$0xf] %v1600
          %1633 = vst [vmem:[%s403 + $0x3c] sm:$0xf] %v1601
          %1634 = vst [vmem:[%s403 + $0x40] sm:$0xf] %v1602
          %1635 = vst [vmem:[%s403 + $0x44] sm:$0xf] %v1603
          %1636 = vst [vmem:[%s403 + $0x48] sm:$0xf] %v1604
          %1637 = vst [vmem:[%s403 + $0x4c] sm:$0xf] %v1605
          %1638 = vst [vmem:[%s403 + $0x50] sm:$0xf] %v1606
          %1639 = vst [vmem:[%s403 + $0x54] sm:$0xf] %v1607
          %1640 = vst [vmem:[%s403 + $0x58] sm:$0xf] %v1608
          %1641 = vst [vmem:[%s403 + $0x5c] sm:$0xf] %v1609
          %1642 = vst [vmem:[%s403 + $0x60] sm:$0xf] %v1610
          %1643 = vst [vmem:[%s403 + $0x64] sm:$0xf] %v1611
          %1644 = vst [vmem:[%s403 + $0x68] sm:$0xf] %v1612
          %1645 = vst [vmem:[%s403 + $0x6c] sm:$0xf] %v1613
          %1646 = vst [vmem:[%s403 + $0x70] sm:$0xf] %v1614
          %1647 = vst [vmem:[%s403 + $0x74] sm:$0xf] %v1615
          %1648 = vst [vmem:[%s403 + $0x78] sm:$0xf] %v1616
          %1649 = vst [vmem:[%s403 + $0x7c] sm:$0xf] %v1617
        $region83: #{tpu_custom_call.1} parent=58 // pred_fallthru
          _
        %s1650 = sand.u32 %s170, 1
        %s1651 = scalar_lea.sflag [#allocation6], %s1650
        %s1652 = sand.u32 %s170, 1
        %s1653 = smul.addr %s1652, 128
        %s1654 = scalar_lea.vmem [#allocation10], %s1653
        // Predicated region
        $region84: #{tpu_custom_call.1} parent=58 // pred_check
          %p1655 = pneg %p180
        $region85: #{tpu_custom_call.1} parent=58 // pred_check_branch
          %1657 = sbr.rel (%p1655) target = $region87
        $region86: #{tpu_custom_call.1} parent=58 // pred_region
          %s1658 = smul.u32 32, %s27
          %1660 = vsyncadd %s1651, 0
          %s1661 = smul.addr %s1658, 4
          %s1662 = scalar_lea.hbm %s5, %s1661
          %s1663 = sshll.u32 %s1654, 4
          %s1664 = int_to_ptr.vmem [resolvable:$true] %s1663
          %s1665 = sshll.u32 %s1662, 4
          %s1666 = int_to_ptr.hbm [resolvable:$true] %s1665
          %1671 = dma.vmem_to_hbm [thread:$0]  %s1664, 2048, %s1666, %s1651, 64, 64, 4
        $region87: #{tpu_custom_call.1} parent=58 // pred_fallthru
          _
      $region59: #{tpu_custom_call.1} parent=5 // pred_fallthru
        _
      %p1672 = scmp.le.s32.totalorder 2, %s18
      // Predicated region
      $region88: #{tpu_custom_call.1} parent=5 // pred_check
        %p1673 = pneg %p1672
      $region89: #{tpu_custom_call.1} parent=5 // pred_check_branch
        %1675 = sbr.rel (%p1673) target = $region91
      $region90: #{tpu_custom_call.1} parent=5 // pred_region
        %s1676 = ssub.s32 %s18, 2
        // Predicated region
        $region92: #{tpu_custom_call.1} parent=90 // pred_check
          %p1677 = pneg %p186
        $region93: #{tpu_custom_call.1} parent=90 // pred_check_branch
          %1679 = sbr.rel (%p1677) target = $region95
        $region94: #{tpu_custom_call.1} parent=90 // pred_region
          %s1680 = sand.u32 %s171, 1
          %s1681 = scalar_lea.sflag [#allocation6], %s1680
          %s1682 = sand.u32 %s171, 1
          %s1683 = smul.addr %s1682, 128
          %s1684 = scalar_lea.vmem [#allocation10], %s1683
          %1686 = dma.done %s1681, 2048
        $region95: #{tpu_custom_call.1} parent=90 // pred_fallthru
          _
      $region91: #{tpu_custom_call.1} parent=5 // pred_fallthru
        _
    $region6: #{tpu_custom_call.1} parent=1 // loop_footer
      %s22 = sadd.s32 1, %s18
    $region7: #{tpu_custom_call.1} parent=1 // loop_footer_branch
      %17 = sbr.rel target = $region3
    $region8: #{tpu_custom_call.1} parent=1 // loop_exit
      _
    %1687 = vsyncpa [#allocation5], 1
    %s1688 = scalar_lea.sflag [#allocation5], 1
    %1689 = vsyncpa %s1688, 1
    %1690 = vsyncpa [#allocation8], 1
    %1691 = vsyncpa [#allocation6], 1
    %s1692 = scalar_lea.sflag [#allocation6], 1
    %1693 = vsyncpa %s1692, 1

</llo_original>
